<compile_context>
chip_gen: v6e
topology: v6e:2x2x1
jax: 0.10.0
libtpu: 0.0.40
codegen_flags: <defaults>
</compile_context>

<pallas_src>
import jax
import jax.numpy as jnp
from jax.experimental import pallas as pl
from jax.experimental.pallas import tpu as pltpu

# ---------------- hyperparameters (small, consistent with the module) --------
B, W, N = 2, 8, 16                 # batch, window (time), points per frame
PC_FEAT, TRACK_FEAT = 4, 8
FEAT = PC_FEAT + TRACK_FEAT - 2    # 10 = 3 (xyz) + 7 (track feats)
H_FUSE = 64                        # FuseEncoder hidden width
D = 32                             # encoder_out_size
DH = 32                            # dec_out_size (head hidden width)

BW = B * W                         # 16 frames total
ROWS = B * W * N                   # 256 fused points total
ROWS_OUT = BW + B                  # 18: per-frame rows + per-batch pooled rows
OUT_LANES = 128                    # lane-dense packed-head output width
SCORE_COL = 7                      # packed cols: center 0:3, size 3:6, rot 6, score 7

# packed weight array layouts (row offsets, all starts multiples of 8)
W64_ROWS = 24     # [0:4) w1_pc(pad) | [8:16) w1_tr(pad) | [16:17) b1
W32_ROWS = 160    # [0:64) w2 | [64:96) wt_x | [96:128) wt_p | [128:129) b2
                  # [136:137) bt | [144:160) pos-enc tiled over batch
W128_ROWS = 176   # [0:32) whA | [32:33) bhA | [40:168) whB (block-diag) | [168:169) bhB


# ======================= single fused forward kernel =========================
def fused_kernel(pcs_ref, tracks_ref, w64_ref, w32_ref, w128_ref, out_ref):
    pcs = pcs_ref[...]                                   # (ROWS, 4)
    tracks = tracks_ref[...]                             # (BW, 8)

    # ---- FuseEncoder: per-point MLP; concat(xyz, track) folded into 2 matmuls
    w1_pc = w64_ref[pl.ds(0, PC_FEAT), :]                # (4, 64), 4th row = 0
    w1_tr = w64_ref[pl.ds(8, TRACK_FEAT), :]             # (8, 64), 8th row = 0
    b1 = w64_ref[pl.ds(16, 1), :]                        # (1, 64)
    w2 = w32_ref[pl.ds(0, H_FUSE), :]                    # (64, 32)
    b2 = w32_ref[pl.ds(128, 1), :]                       # (1, 32)

    h_pc = jnp.dot(pcs, w1_pc, preferred_element_type=jnp.float32)          # (ROWS, 64)
    h_tr = jnp.dot(tracks, w1_tr, preferred_element_type=jnp.float32) + b1  # (BW, 64)
    h = jnp.maximum(h_pc.reshape(BW, N, H_FUSE) + h_tr.reshape(BW, 1, H_FUSE), 0.0)
    h = h.reshape(ROWS, H_FUSE)
    f = jnp.maximum(jnp.dot(h, w2, preferred_element_type=jnp.float32) + b2, 0.0)
    enc = jnp.max(f.reshape(BW, N, D), axis=1)           # (BW, D) per-frame max

    # ---- mask fully-padded frames, add sinusoidal positional encoding -------
    pad = jnp.sum(tracks, axis=-1, keepdims=True) == 0.0  # (BW, 1)
    pe = w32_ref[pl.ds(144, BW), :]                       # (BW, D) PE tiled over B
    enc = jnp.where(pad, 0.0, enc) + pe

    # ---- PoolTempEnc: ReLU(Linear([x, max_W(x)])) ----------------------------
    wt_x = w32_ref[pl.ds(64, D), :]                       # (D, D)
    wt_p = w32_ref[pl.ds(96, D), :]                       # (D, D)
    bt = w32_ref[pl.ds(136, 1), :]                        # (1, D)
    pooled = jnp.max(enc.reshape(B, W, D), axis=1)        # (B, D) per-batch max
    pp = jnp.dot(pooled, wt_p, preferred_element_type=jnp.float32)        # (B, D)
    t_pre = jnp.dot(enc, wt_x, preferred_element_type=jnp.float32) + bt   # (BW, D)
    t = jnp.maximum(t_pre.reshape(B, W, D) + pp.reshape(B, 1, D), 0.0)
    t = t.reshape(BW, D)

    # ---- DecoderHeads: 4 heads packed into one lane-dense 128-wide MLP ------
    t_pooled = jnp.max(t.reshape(B, W, D), axis=1)        # (B, D) for size head
    t_aug = jnp.concatenate([t, t_pooled], axis=0)        # (ROWS_OUT, D)

    whA = w128_ref[pl.ds(0, D), :]                        # (D, 128)
    bhA = w128_ref[pl.ds(32, 1), :]                       # (1, 128)
    whB = w128_ref[pl.ds(40, 4 * DH), :]                  # (128, 128) block-diag
    bhB = w128_ref[pl.ds(168, 1), :]                      # (1, 128)

    hh = jnp.maximum(jnp.dot(t_aug, whA, preferred_element_type=jnp.float32) + bhA,
                     0.0)                                 # (ROWS_OUT, 128)
    raw = jnp.dot(hh, whB, preferred_element_type=jnp.float32) + bhB
    lane = jax.lax.broadcasted_iota(jnp.int32, raw.shape, 1)
    out_ref[...] = jnp.where(lane == SCORE_COL, jax.nn.sigmoid(raw), raw)


def _fused_call(pcs2d, tracks2d, w64, w32, w128):
    return pl.pallas_call(
        fused_kernel,
        out_shape=jax.ShapeDtypeStruct((ROWS_OUT, OUT_LANES), jnp.float32),
        grid=(1,),
        in_specs=[
            pl.BlockSpec((ROWS, PC_FEAT), lambda i: (0, 0)),
            pl.BlockSpec((BW, TRACK_FEAT), lambda i: (0, 0)),
            pl.BlockSpec((W64_ROWS, H_FUSE), lambda i: (0, 0)),
            pl.BlockSpec((W32_ROWS, D), lambda i: (0, 0)),
            pl.BlockSpec((W128_ROWS, OUT_LANES), lambda i: (0, 0)),
        ],
        out_specs=pl.BlockSpec((ROWS_OUT, OUT_LANES), lambda i: (0, 0)),
        compiler_params=pltpu.CompilerParams(
            dimension_semantics=("arbitrary",)),
    )(pcs2d, tracks2d, w64, w32, w128)


# =============== parameters, positional encoding, packing ====================
def sinusoidal_pe(length, d_model):
    pos = jnp.arange(length, dtype=jnp.float32)[:, None]
    i = jnp.arange(0, d_model, 2, dtype=jnp.float32)
    div = jnp.exp(-jnp.log(10000.0) * i / d_model)
    pe = jnp.zeros((length, d_model), jnp.float32)
    pe = pe.at[:, 0::2].set(jnp.sin(pos * div))
    pe = pe.at[:, 1::2].set(jnp.cos(pos * div))
    return pe


def init_params(key):
    ks = jax.random.split(key, 12)

    def lin(k, fin, fout, scale=0.1):
        kw, kb = jax.random.split(k)
        return (scale * jax.random.normal(kw, (fin, fout), jnp.float32),
                0.01 * jax.random.normal(kb, (1, fout), jnp.float32))

    p = {}
    p["w1"], p["b1"] = lin(ks[0], FEAT, H_FUSE)        # FuseEncoder
    p["w2"], p["b2"] = lin(ks[1], H_FUSE, D)
    p["wt_x"], p["bt"] = lin(ks[2], D, D)              # PoolTempEnc (split cat)
    p["wt_p"], _ = lin(ks[3], D, D)
    p["wc1"], p["bc1"] = lin(ks[4], D, DH)             # heads
    p["wc2"], p["bc2"] = lin(ks[5], DH, 3)
    p["ws1"], p["bs1"] = lin(ks[6], D, DH)
    p["ws2"], p["bs2"] = lin(ks[7], DH, 3)
    p["wr1"], p["br1"] = lin(ks[8], D, DH)
    p["wr2"], p["br2"] = lin(ks[9], DH, 1)
    p["wg1"], p["bg1"] = lin(ks[10], D, DH)
    p["wg2"], p["bg2"] = lin(ks[11], DH, 1)
    return p


def pack_params(p, pe):
    """Pack all weights/biases/PE into 3 lane-friendly arrays (done once)."""
    w64 = jnp.zeros((W64_ROWS, H_FUSE), jnp.float32)
    w64 = w64.at[0:3].set(p["w1"][0:3])          # xyz rows (4th pc feat -> 0)
    w64 = w64.at[8:15].set(p["w1"][3:10])        # track rows (8th feat -> 0)
    w64 = w64.at[16:17].set(p["b1"])

    w32 = jnp.zeros((W32_ROWS, D), jnp.float32)
    w32 = w32.at[0:64].set(p["w2"])
    w32 = w32.at[64:96].set(p["wt_x"])
    w32 = w32.at[96:128].set(p["wt_p"])
    w32 = w32.at[128:129].set(p["b2"])
    w32 = w32.at[136:137].set(p["bt"])
    w32 = w32.at[144:160].set(jnp.tile(pe, (B, 1)))

    w128 = jnp.zeros((W128_ROWS, OUT_LANES), jnp.float32)
    w128 = w128.at[0:32].set(jnp.concatenate(
        [p["wc1"], p["ws1"], p["wr1"], p["wg1"]], axis=1))
    w128 = w128.at[32:33].set(jnp.concatenate(
        [p["bc1"], p["bs1"], p["br1"], p["bg1"]], axis=1))
    # block-diagonal second layer: rows 40..168, cols 0:3 | 3:6 | 6 | 7
    w128 = w128.at[40:72, 0:3].set(p["wc2"])
    w128 = w128.at[72:104, 3:6].set(p["ws2"])
    w128 = w128.at[104:136, 6:7].set(p["wr2"])
    w128 = w128.at[136:168, 7:8].set(p["wg2"])
    w128 = w128.at[168:169, 0:3].set(p["bc2"])
    w128 = w128.at[168:169, 3:6].set(p["bs2"])
    w128 = w128.at[168:169, 6:7].set(p["br2"])
    w128 = w128.at[168:169, 7:8].set(p["bg2"])
    return {"W64": w64, "W32": w32, "W128": w128}


# =============== forward wrapper & pure-JAX reference ========================
@jax.jit
def forward(tracks, pcs, packed):
    pcs2d = pcs.reshape(ROWS, PC_FEAT)
    tracks2d = tracks.reshape(BW, TRACK_FEAT)
    out = _fused_call(pcs2d, tracks2d, packed["W64"], packed["W32"], packed["W128"])
    center = out[:BW, 0:3].reshape(B, W, 3)
    size = out[BW:BW + B, 3:6]                       # (B, 3) from pooled rows
    rot = out[:BW, 6:7].reshape(B, W, 1)
    score = out[:BW, 7:8].reshape(B, W, 1)
    return center, size, rot, score


def reference(tracks, pcs, p, pe):
    s = jnp.sum(tracks, axis=-1)
    mask = (s == 0)[..., None]                                        # (B,W,1)
    tr = jnp.broadcast_to(tracks[:, :, None, :], (B, W, N, TRACK_FEAT))
    tp = jnp.concatenate([pcs[..., :3], tr[..., :7]], axis=-1)        # (B,W,N,10)
    h = jax.nn.relu(tp @ p["w1"] + p["b1"])
    f = jax.nn.relu(h @ p["w2"] + p["b2"])
    enc = jnp.max(f, axis=2)                                          # (B,W,D)
    enc = jnp.where(mask, 0.0, enc) + pe[None]
    pooled = jnp.max(enc, axis=1, keepdims=True)
    t = jax.nn.relu(enc @ p["wt_x"] + pooled @ p["wt_p"] + p["bt"])
    head = lambda x, wa, ba, wb, bb: jax.nn.relu(x @ wa + ba) @ wb + bb
    center = head(t, p["wc1"], p["bc1"], p["wc2"], p["bc2"])
    rot = head(t, p["wr1"], p["br1"], p["wr2"], p["br2"])
    score = jax.nn.sigmoid(head(t, p["wg1"], p["bg1"], p["wg2"], p["bg2"]))
    t_pool = jnp.max(t, axis=1)
    size = head(t_pool, p["ws1"], p["bs1"], p["ws2"], p["bs2"])
    return center, size, rot, score


if __name__ == "__main__":
    key = jax.random.PRNGKey(0)
    k_tr, k_pc, k_p = jax.random.split(key, 3)
    tracks = jax.random.normal(k_tr, (B, W, TRACK_FEAT), jnp.float32)
    pcs = jax.random.normal(k_pc, (B, W, N, PC_FEAT), jnp.float32)
    # make some frames fully padded (track row == 0) to exercise the mask
    tracks = tracks.at[1, 6:].set(0.0)

    params = init_params(k_p)
    pe = sinusoidal_pe(W, D)
    packed = pack_params(params, pe)

    outs = forward(tracks, pcs, packed)
    outs = jax.block_until_ready(outs)

    refs = reference(tracks, pcs, params, pe)
    for o, r in zip(outs, refs):
        assert o.shape == r.shape, (o.shape, r.shape)
        assert jnp.allclose(o, r, atol=1e-4, rtol=1e-4), \
            float(jnp.max(jnp.abs(o - r)))

    print("KERNEL_OK")
</pallas_src>

<mosaic_0001>
module attributes {stable_mosaic.version = 11 : i64} {
  func.func @fused_kernel(%arg0: i32, %arg1: memref<256x4xf32, #tpu.memory_space<vmem>>, %arg2: memref<16x8xf32, #tpu.memory_space<vmem>>, %arg3: memref<24x64xf32, #tpu.memory_space<vmem>>, %arg4: memref<160x32xf32, #tpu.memory_space<vmem>>, %arg5: memref<176x128xf32, #tpu.memory_space<vmem>>, %arg6: memref<18x128xf32, #tpu.memory_space<vmem>>) attributes {dimension_semantics = [#tpu.dimension_semantics<arbitrary>], iteration_bounds = array<i64: 1>, scalar_prefetch = 0 : i64, scratch_operands = 0 : i64, tpu.core_type = #tpu.core_type<tc>, window_params = [{pipeline_mode = #tpu.pipeline_mode<synchronous>, transform_indices = @transform_0, window_bounds = array<i64: 256, 4>}, {pipeline_mode = #tpu.pipeline_mode<synchronous>, transform_indices = @transform_1, window_bounds = array<i64: 16, 8>}, {pipeline_mode = #tpu.pipeline_mode<synchronous>, transform_indices = @transform_2, window_bounds = array<i64: 24, 64>}, {pipeline_mode = #tpu.pipeline_mode<synchronous>, transform_indices = @transform_3, window_bounds = array<i64: 160, 32>}, {pipeline_mode = #tpu.pipeline_mode<synchronous>, transform_indices = @transform_4, window_bounds = array<i64: 176, 128>}, {pipeline_mode = #tpu.pipeline_mode<synchronous>, transform_indices = @transform_5, window_bounds = array<i64: 18, 128>}]} {
    %c0 = arith.constant 0 : index
    %c0_0 = arith.constant 0 : index
    %0 = vector.load %arg1[%c0, %c0_0] : memref<256x4xf32, #tpu.memory_space<vmem>>, vector<256x4xf32>
    %c0_1 = arith.constant 0 : index
    %c0_2 = arith.constant 0 : index
    %1 = vector.load %arg2[%c0_1, %c0_2] : memref<16x8xf32, #tpu.memory_space<vmem>>, vector<16x8xf32>
    %c0_3 = arith.constant 0 : index
    %c0_4 = arith.constant 0 : index
    %2 = vector.load %arg3[%c0_3, %c0_4] : memref<24x64xf32, #tpu.memory_space<vmem>>, vector<4x64xf32>
    %c8 = arith.constant 8 : index
    %c0_5 = arith.constant 0 : index
    %3 = vector.load %arg3[%c8, %c0_5] : memref<24x64xf32, #tpu.memory_space<vmem>>, vector<8x64xf32>
    %c16 = arith.constant 16 : index
    %c0_6 = arith.constant 0 : index
    %4 = vector.load %arg3[%c16, %c0_6] : memref<24x64xf32, #tpu.memory_space<vmem>>, vector<1x64xf32>
    %c0_7 = arith.constant 0 : index
    %c0_8 = arith.constant 0 : index
    %5 = vector.load %arg4[%c0_7, %c0_8] : memref<160x32xf32, #tpu.memory_space<vmem>>, vector<64x32xf32>
    %c128 = arith.constant 128 : index
    %c0_9 = arith.constant 0 : index
    %6 = vector.load %arg4[%c128, %c0_9] : memref<160x32xf32, #tpu.memory_space<vmem>>, vector<1x32xf32>
    %cst = arith.constant dense<0.000000e+00> : vector<256x64xf32>
    %7 = tpu.matmul %0, %2, %cst {dimension_numbers = #tpu.dot_dimension_numbers<[1], [0], [0], [1], [0, 0, 1, 1], [], []>} : vector<256x4xf32>, vector<4x64xf32>, vector<256x64xf32> -> vector<256x64xf32>
    %cst_10 = arith.constant dense<0.000000e+00> : vector<16x64xf32>
    %8 = tpu.matmul %1, %3, %cst_10 {dimension_numbers = #tpu.dot_dimension_numbers<[1], [0], [0], [1], [0, 0, 1, 1], [], []>} : vector<16x8xf32>, vector<8x64xf32>, vector<16x64xf32> -> vector<16x64xf32>
    %9 = vector.broadcast %4 : vector<1x64xf32> to vector<16x64xf32>
    %10 = arith.addf %8, %9 : vector<16x64xf32>
    %11 = vector.shape_cast %7 : vector<256x64xf32> to vector<16x16x64xf32>
    %12 = vector.shape_cast %10 : vector<16x64xf32> to vector<16x1x64xf32>
    %13 = vector.broadcast %12 : vector<16x1x64xf32> to vector<16x16x64xf32>
    %14 = arith.addf %11, %13 : vector<16x16x64xf32>
    %cst_11 = arith.constant 0.000000e+00 : f32
    %15 = vector.broadcast %cst_11 : f32 to vector<16x16x64xf32>
    %16 = arith.maximumf %14, %15 : vector<16x16x64xf32>
    %17 = vector.shape_cast %16 : vector<16x16x64xf32> to vector<256x64xf32>
    %cst_12 = arith.constant dense<0.000000e+00> : vector<256x32xf32>
    %18 = tpu.matmul %17, %5, %cst_12 {dimension_numbers = #tpu.dot_dimension_numbers<[1], [0], [0], [1], [0, 0, 1, 1], [], []>} : vector<256x64xf32>, vector<64x32xf32>, vector<256x32xf32> -> vector<256x32xf32>
    %19 = vector.broadcast %6 : vector<1x32xf32> to vector<256x32xf32>
    %20 = arith.addf %18, %19 : vector<256x32xf32>
    %cst_13 = arith.constant 0.000000e+00 : f32
    %21 = vector.broadcast %cst_13 : f32 to vector<256x32xf32>
    %22 = arith.maximumf %20, %21 : vector<256x32xf32>
    %23 = vector.shape_cast %22 : vector<256x32xf32> to vector<16x16x32xf32>
    %cst_14 = arith.constant dense<0xFF800000> : vector<16x32xf32>
    %24 = vector.multi_reduction <maximumf>, %23, %cst_14 [1] : vector<16x16x32xf32> to vector<16x32xf32>
    %cst_15 = arith.constant dense<0.000000e+00> : vector<16xf32>
    %25 = vector.multi_reduction <add>, %1, %cst_15 [1] : vector<16x8xf32> to vector<16xf32>
    %26 = vector.shape_cast %25 : vector<16xf32> to vector<16x1xf32>
    %cst_16 = arith.constant 0.000000e+00 : f32
    %27 = vector.broadcast %cst_16 : f32 to vector<16x1xf32>
    %28 = arith.cmpf oeq, %26, %27 : vector<16x1xf32>
    %c144 = arith.constant 144 : index
    %c0_17 = arith.constant 0 : index
    %29 = vector.load %arg4[%c144, %c0_17] : memref<160x32xf32, #tpu.memory_space<vmem>>, vector<16x32xf32>
    %cst_18 = arith.constant 0.000000e+00 : f32
    %30 = vector.shape_cast %28 : vector<16x1xi1> to vector<16x1xi1>
    %31 = vector.broadcast %30 : vector<16x1xi1> to vector<16x32xi1>
    %32 = vector.broadcast %cst_18 : f32 to vector<16x32xf32>
    %33 = arith.select %31, %32, %24 : vector<16x32xi1>, vector<16x32xf32>
    %34 = arith.addf %33, %29 : vector<16x32xf32>
    %c64 = arith.constant 64 : index
    %c0_19 = arith.constant 0 : index
    %35 = vector.load %arg4[%c64, %c0_19] : memref<160x32xf32, #tpu.memory_space<vmem>>, vector<32x32xf32>
    %c96 = arith.constant 96 : index
    %c0_20 = arith.constant 0 : index
    %36 = vector.load %arg4[%c96, %c0_20] : memref<160x32xf32, #tpu.memory_space<vmem>>, vector<32x32xf32>
    %c136 = arith.constant 136 : index
    %c0_21 = arith.constant 0 : index
    %37 = vector.load %arg4[%c136, %c0_21] : memref<160x32xf32, #tpu.memory_space<vmem>>, vector<1x32xf32>
    %38 = vector.shape_cast %34 : vector<16x32xf32> to vector<2x8x32xf32>
    %cst_22 = arith.constant dense<0xFF800000> : vector<2x32xf32>
    %39 = vector.multi_reduction <maximumf>, %38, %cst_22 [1] : vector<2x8x32xf32> to vector<2x32xf32>
    %cst_23 = arith.constant dense<0.000000e+00> : vector<2x32xf32>
    %40 = tpu.matmul %39, %36, %cst_23 {dimension_numbers = #tpu.dot_dimension_numbers<[1], [0], [0], [1], [0, 0, 1, 1], [], []>} : vector<2x32xf32>, vector<32x32xf32>, vector<2x32xf32> -> vector<2x32xf32>
    %cst_24 = arith.constant dense<0.000000e+00> : vector<16x32xf32>
    %41 = tpu.matmul %34, %35, %cst_24 {dimension_numbers = #tpu.dot_dimension_numbers<[1], [0], [0], [1], [0, 0, 1, 1], [], []>} : vector<16x32xf32>, vector<32x32xf32>, vector<16x32xf32> -> vector<16x32xf32>
    %42 = vector.broadcast %37 : vector<1x32xf32> to vector<16x32xf32>
    %43 = arith.addf %41, %42 : vector<16x32xf32>
    %44 = vector.shape_cast %43 : vector<16x32xf32> to vector<2x8x32xf32>
    %45 = vector.shape_cast %40 : vector<2x32xf32> to vector<2x1x32xf32>
    %46 = vector.broadcast %45 : vector<2x1x32xf32> to vector<2x8x32xf32>
    %47 = arith.addf %44, %46 : vector<2x8x32xf32>
    %cst_25 = arith.constant 0.000000e+00 : f32
    %48 = vector.broadcast %cst_25 : f32 to vector<2x8x32xf32>
    %49 = arith.maximumf %47, %48 : vector<2x8x32xf32>
    %50 = vector.shape_cast %49 : vector<2x8x32xf32> to vector<16x32xf32>
    %51 = vector.shape_cast %50 : vector<16x32xf32> to vector<2x8x32xf32>
    %cst_26 = arith.constant dense<0xFF800000> : vector<2x32xf32>
    %52 = vector.multi_reduction <maximumf>, %51, %cst_26 [1] : vector<2x8x32xf32> to vector<2x32xf32>
    %53 = tpu.concatenate %50, %52 in 0 : vector<16x32xf32>, vector<2x32xf32> -> vector<18x32xf32>
    %c0_27 = arith.constant 0 : index
    %c0_28 = arith.constant 0 : index
    %54 = vector.load %arg5[%c0_27, %c0_28] : memref<176x128xf32, #tpu.memory_space<vmem>>, vector<32x128xf32>
    %c32 = arith.constant 32 : index
    %c0_29 = arith.constant 0 : index
    %55 = vector.load %arg5[%c32, %c0_29] : memref<176x128xf32, #tpu.memory_space<vmem>>, vector<1x128xf32>
    %c40 = arith.constant 40 : index
    %c0_30 = arith.constant 0 : index
    %56 = vector.load %arg5[%c40, %c0_30] : memref<176x128xf32, #tpu.memory_space<vmem>>, vector<128x128xf32>
    %c168 = arith.constant 168 : index
    %c0_31 = arith.constant 0 : index
    %57 = vector.load %arg5[%c168, %c0_31] : memref<176x128xf32, #tpu.memory_space<vmem>>, vector<1x128xf32>
    %cst_32 = arith.constant dense<0.000000e+00> : vector<18x128xf32>
    %58 = tpu.matmul %53, %54, %cst_32 {dimension_numbers = #tpu.dot_dimension_numbers<[1], [0], [0], [1], [0, 0, 1, 1], [], []>} : vector<18x32xf32>, vector<32x128xf32>, vector<18x128xf32> -> vector<18x128xf32>
    %59 = vector.broadcast %55 : vector<1x128xf32> to vector<18x128xf32>
    %60 = arith.addf %58, %59 : vector<18x128xf32>
    %cst_33 = arith.constant 0.000000e+00 : f32
    %61 = vector.broadcast %cst_33 : f32 to vector<18x128xf32>
    %62 = arith.maximumf %60, %61 : vector<18x128xf32>
    %cst_34 = arith.constant dense<0.000000e+00> : vector<18x128xf32>
    %63 = tpu.matmul %62, %56, %cst_34 {dimension_numbers = #tpu.dot_dimension_numbers<[1], [0], [0], [1], [0, 0, 1, 1], [], []>} : vector<18x128xf32>, vector<128x128xf32>, vector<18x128xf32> -> vector<18x128xf32>
    %64 = vector.broadcast %57 : vector<1x128xf32> to vector<18x128xf32>
    %65 = arith.addf %63, %64 : vector<18x128xf32>
    %66 = tpu.iota {dimensions = array<i32: 1>} : vector<18x128xi32>
    %c7_i32 = arith.constant 7 : i32
    %67 = vector.broadcast %c7_i32 : i32 to vector<18x128xi32>
    %68 = arith.cmpi eq, %66, %67 : vector<18x128xi32>
    %69 = arith.negf %65 : vector<18x128xf32>
    %70 = math.exp %69 : vector<18x128xf32>
    %cst_35 = arith.constant 1.000000e+00 : f32
    %71 = vector.broadcast %cst_35 : f32 to vector<18x128xf32>
    %72 = arith.addf %71, %70 : vector<18x128xf32>
    %73 = arith.divf %71, %72 : vector<18x128xf32>
    %74 = arith.select %68, %73, %65 : vector<18x128xi1>, vector<18x128xf32>
    %c0_36 = arith.constant 0 : index
    %c0_37 = arith.constant 0 : index
    %75 = vector.load %arg6[%c0_36, %c0_37] : memref<18x128xf32, #tpu.memory_space<vmem>>, vector<18x128xf32>
    tpu.vector_store %arg6[%c0_36, %c0_37], %74 {strides = array<i32>} : memref<18x128xf32, #tpu.memory_space<vmem>>, vector<18x128xf32>,
    return
  }
  func.func @transform_0(%arg0: i32) -> (i32, i32) {
    %c0_i32 = arith.constant 0 : i32
    %c0_i32_0 = arith.constant 0 : i32
    %c0_i32_1 = arith.constant 0 : i32
    return %c0_i32, %c0_i32_0 : i32, i32
  }
  func.func @transform_1(%arg0: i32) -> (i32, i32) {
    %c0_i32 = arith.constant 0 : i32
    %c0_i32_0 = arith.constant 0 : i32
    %c0_i32_1 = arith.constant 0 : i32
    return %c0_i32, %c0_i32_0 : i32, i32
  }
  func.func @transform_2(%arg0: i32) -> (i32, i32) {
    %c0_i32 = arith.constant 0 : i32
    %c0_i32_0 = arith.constant 0 : i32
    %c0_i32_1 = arith.constant 0 : i32
    return %c0_i32, %c0_i32_0 : i32, i32
  }
  func.func @transform_3(%arg0: i32) -> (i32, i32) {
    %c0_i32 = arith.constant 0 : i32
    %c0_i32_0 = arith.constant 0 : i32
    %c0_i32_1 = arith.constant 0 : i32
    return %c0_i32, %c0_i32_0 : i32, i32
  }
  func.func @transform_4(%arg0: i32) -> (i32, i32) {
    %c0_i32 = arith.constant 0 : i32
    %c0_i32_0 = arith.constant 0 : i32
    %c0_i32_1 = arith.constant 0 : i32
    return %c0_i32, %c0_i32_0 : i32, i32
  }
  func.func @transform_5(%arg0: i32) -> (i32, i32) {
    %c0_i32 = arith.constant 0 : i32
    %c0_i32_0 = arith.constant 0 : i32
    %c0_i32_1 = arith.constant 0 : i32
    return %c0_i32, %c0_i32_0 : i32, i32
  }
}

</mosaic_0001>

<llo_original>
// kernel: forward.1
$region0: #{forward.1}
  #allocation0 [shape = 'u32[]', space=smem, size = 0x4, offset = 0x4, fixed_abs, tag = 'smem constant byte address 0x4 - core index']
  #allocation1 [shape = 'u32[144,128]{1,0:T(1,128)}', space=vmem, size = 0x12000, scoped, tag = 'internal scratch']
  %s0 = inlined_call_operand.vmem [shape: f32[256,4], index: 0, kind: input, shape index: {}]
  %s1 = inlined_call_operand.vmem [shape: f32[16,8], index: 1, kind: input, shape index: {}]
  %s2 = inlined_call_operand.vmem [shape: f32[24,64], index: 2, kind: input, shape index: {}]
  %s3 = inlined_call_operand.vmem [shape: f32[160,32], index: 3, kind: input, shape index: {}]
  %s4 = inlined_call_operand.vmem [shape: f32[176,128], index: 4, kind: input, shape index: {}]
  %s5 = inlined_call_operand.vmem [shape: f32[18,128], index: 5, kind: output, shape index: {}]
  %s6 = sld [smem:[#allocation0]]
  $region30: #{forward.1} parent=0
    _
  %s8 = ssub.s32 1, %s6
  %s9 = scalar_select 0, %s8, %s6
  // Predicated region
  $region2: #{forward.1} parent=0 // pred_check
    _
  $region3: #{forward.1} parent=0 // pred_check_branch
    %11 = sbr.rel (0) target = $region5
  $region4: #{forward.1} parent=0 // pred_region
    _
  $region5: #{forward.1} parent=0 // pred_fallthru
    _
  // Predicated region
  $region6: #{forward.1} parent=0 // pred_check
    _
  $region7: #{forward.1} parent=0 // pred_check_branch
    %13 = sbr.rel (0) target = $region9
  $region8: #{forward.1} parent=0 // pred_region
    _
  $region9: #{forward.1} parent=0 // pred_fallthru
    _
  // Predicated region
  $region10: #{forward.1} parent=0 // pred_check
    _
  $region11: #{forward.1} parent=0 // pred_check_branch
    %15 = sbr.rel (0) target = $region13
  $region12: #{forward.1} parent=0 // pred_region
    _
  $region13: #{forward.1} parent=0 // pred_fallthru
    _
  // Predicated region
  $region14: #{forward.1} parent=0 // pred_check
    _
  $region15: #{forward.1} parent=0 // pred_check_branch
    %17 = sbr.rel (0) target = $region17
  $region16: #{forward.1} parent=0 // pred_region
    _
  $region17: #{forward.1} parent=0 // pred_fallthru
    _
  // Predicated region
  $region18: #{forward.1} parent=0 // pred_check
    _
  $region19: #{forward.1} parent=0 // pred_check_branch
    %19 = sbr.rel (0) target = $region21
  $region20: #{forward.1} parent=0 // pred_region
    _
  $region21: #{forward.1} parent=0 // pred_fallthru
    _
  %v20 = vld [vmem:[%s0] sm:$0xff]
  %v21 = vld [vmem:[%s0 + $0x8] sm:$0xff]
  %v22 = vld [vmem:[%s0 + $0x10] sm:$0xff]
  %v23 = vld [vmem:[%s0 + $0x18] sm:$0xff]
  %v24 = vld [vmem:[%s0 + $0x20] sm:$0xff]
  %v25 = vld [vmem:[%s0 + $0x28] sm:$0xff]
  %v26 = vld [vmem:[%s0 + $0x30] sm:$0xff]
  %v27 = vld [vmem:[%s0 + $0x38] sm:$0xff]
  %v28 = vld [vmem:[%s0 + $0x40] sm:$0xff]
  %v29 = vld [vmem:[%s0 + $0x48] sm:$0xff]
  %v30 = vld [vmem:[%s0 + $0x50] sm:$0xff]
  %v31 = vld [vmem:[%s0 + $0x58] sm:$0xff]
  %v32 = vld [vmem:[%s0 + $0x60] sm:$0xff]
  %v33 = vld [vmem:[%s0 + $0x68] sm:$0xff]
  %v34 = vld [vmem:[%s0 + $0x70] sm:$0xff]
  %v35 = vld [vmem:[%s0 + $0x78] sm:$0xff]
  %v36 = vld [vmem:[%s0 + $0x80] sm:$0xff]
  %v37 = vld [vmem:[%s0 + $0x88] sm:$0xff]
  %v38 = vld [vmem:[%s0 + $0x90] sm:$0xff]
  %v39 = vld [vmem:[%s0 + $0x98] sm:$0xff]
  %v40 = vld [vmem:[%s0 + $0xa0] sm:$0xff]
  %v41 = vld [vmem:[%s0 + $0xa8] sm:$0xff]
  %v42 = vld [vmem:[%s0 + $0xb0] sm:$0xff]
  %v43 = vld [vmem:[%s0 + $0xb8] sm:$0xff]
  %v44 = vld [vmem:[%s0 + $0xc0] sm:$0xff]
  %v45 = vld [vmem:[%s0 + $0xc8] sm:$0xff]
  %v46 = vld [vmem:[%s0 + $0xd0] sm:$0xff]
  %v47 = vld [vmem:[%s0 + $0xd8] sm:$0xff]
  %v48 = vld [vmem:[%s0 + $0xe0] sm:$0xff]
  %v49 = vld [vmem:[%s0 + $0xe8] sm:$0xff]
  %v50 = vld [vmem:[%s0 + $0xf0] sm:$0xff]
  %v51 = vld [vmem:[%s0 + $0xf8] sm:$0xff]
  %v52 = vld [vmem:[%s1] sm:$0xff]
  %v53 = vld [vmem:[%s1 + $0x8] sm:$0xff]
  %v54 = vld [vmem:[%s2] sm:$0xf]
  %v55 = vld [vmem:[%s2 + $0x8] sm:$0xff]
  %v56 = vld [vmem:[%s2 + $0x10] sm:$0x1]
  %v57 = vld [vmem:[%s3] sm:$0xff]
  %v58 = vld [vmem:[%s3 + $0x8] sm:$0xff]
  %v59 = vld [vmem:[%s3 + $0x10] sm:$0xff]
  %v60 = vld [vmem:[%s3 + $0x18] sm:$0xff]
  %v61 = vld [vmem:[%s3 + $0x20] sm:$0xff]
  %v62 = vld [vmem:[%s3 + $0x28] sm:$0xff]
  %v63 = vld [vmem:[%s3 + $0x30] sm:$0xff]
  %v64 = vld [vmem:[%s3 + $0x38] sm:$0xff]
  %v65 = vld [vmem:[%s3 + $0x80] sm:$0x1]
  %vm66 = vcmask 31744
  %v68 = vsel %vm66, %v20, 0
  %v71 = vsel %vm66, %v21, 0
  %v74 = vsel %vm66, %v22, 0
  %v77 = vsel %vm66, %v23, 0
  %v80 = vsel %vm66, %v24, 0
  %v83 = vsel %vm66, %v25, 0
  %v86 = vsel %vm66, %v26, 0
  %v89 = vsel %vm66, %v27, 0
  %v92 = vsel %vm66, %v28, 0
  %v95 = vsel %vm66, %v29, 0
  %v98 = vsel %vm66, %v30, 0
  %v101 = vsel %vm66, %v31, 0
  %v104 = vsel %vm66, %v32, 0
  %v107 = vsel %vm66, %v33, 0
  %v110 = vsel %vm66, %v34, 0
  %v113 = vsel %vm66, %v35, 0
  %v116 = vsel %vm66, %v36, 0
  %v119 = vsel %vm66, %v37, 0
  %v122 = vsel %vm66, %v38, 0
  %v125 = vsel %vm66, %v39, 0
  %v128 = vsel %vm66, %v40, 0
  %v131 = vsel %vm66, %v41, 0
  %v134 = vsel %vm66, %v42, 0
  %v137 = vsel %vm66, %v43, 0
  %v140 = vsel %vm66, %v44, 0
  %v143 = vsel %vm66, %v45, 0
  %v146 = vsel %vm66, %v46, 0
  %v149 = vsel %vm66, %v47, 0
  %v152 = vsel %vm66, %v48, 0
  %v155 = vsel %vm66, %v49, 0
  %v158 = vsel %vm66, %v50, 0
  %v161 = vsel %vm66, %v51, 0
  %vm163 = vcmask 1043456
  %v165 = vsel %vm163, %v54, 0
  %167 = vmatprep.subr.mxu0 0.0
  %168 = vmatpush1.msra.mxu0 0.0
  %169 = vmatprep.subr.mxu0 0.0
  %170 = vmatpush1.msra.mxu0 0.0
  %171 = vmatprep.subr.mxu0 0.0
  %172 = vmatpush1.msra.mxu0 0.0
  %173 = vmatprep.subr.mxu0 0.0
  %174 = vmatpush1.msra.mxu0 0.0
  %175 = vmatprep.subr.mxu0 0.0
  %176 = vmatpush1.msra.mxu0 0.0
  %177 = vmatprep.subr.mxu0 0.0
  %178 = vmatpush1.msra.mxu0 0.0
  %179 = vmatprep.subr.mxu0 0.0
  %180 = vmatpush1.msra.mxu0 0.0
  %181 = vmatprep.subr.mxu0 0.0
  %182 = vmatpush1.msra.mxu0 0.0
  %183 = vmatprep.subr.mxu0 0.0
  %184 = vmatpush1.msra.mxu0 0.0
  %185 = vmatprep.subr.mxu0 0.0
  %186 = vmatpush1.msra.mxu0 0.0
  %187 = vmatprep.subr.mxu0 0.0
  %188 = vmatpush1.msra.mxu0 0.0
  %189 = vmatprep.subr.mxu0 0.0
  %190 = vmatpush1.msra.mxu0 0.0
  %191 = vmatprep.subr.mxu0 0.0
  %192 = vmatpush1.msra.mxu0 0.0
  %193 = vmatprep.subr.mxu0 0.0
  %194 = vmatpush1.msra.mxu0 0.0
  %195 = vmatprep.subr.mxu0 0.0
  %196 = vmatpush1.msra.mxu0 0.0
  %197 = vmatprep.subr.mxu0 0.0
  %198 = vmatpush1.msra.mxu0 %v165
  %199 = vmatprep.subr.mxu0 0.0
  %200 = vmatpush2.msra.mxu0 0.0
  %201 = vmatprep.subr.mxu0 0.0
  %202 = vmatpush2.msra.mxu0 0.0
  %203 = vmatprep.subr.mxu0 0.0
  %204 = vmatpush2.msra.mxu0 0.0
  %205 = vmatprep.subr.mxu0 0.0
  %206 = vmatpush2.msra.mxu0 0.0
  %207 = vmatprep.subr.mxu0 0.0
  %208 = vmatpush2.msra.mxu0 0.0
  %209 = vmatprep.subr.mxu0 0.0
  %210 = vmatpush2.msra.mxu0 0.0
  %211 = vmatprep.subr.mxu0 0.0
  %212 = vmatpush2.msra.mxu0 0.0
  %213 = vmatprep.subr.mxu0 0.0
  %214 = vmatpush2.msra.mxu0 0.0
  %215 = vmatprep.subr.mxu0 0.0
  %216 = vmatpush2.msra.mxu0 0.0
  %217 = vmatprep.subr.mxu0 0.0
  %218 = vmatpush2.msra.mxu0 0.0
  %219 = vmatprep.subr.mxu0 0.0
  %220 = vmatpush2.msra.mxu0 0.0
  %221 = vmatprep.subr.mxu0 0.0
  %222 = vmatpush2.msra.mxu0 0.0
  %223 = vmatprep.subr.mxu0 0.0
  %224 = vmatpush2.msra.mxu0 0.0
  %225 = vmatprep.subr.mxu0 0.0
  %226 = vmatpush2.msra.mxu0 0.0
  %227 = vmatprep.subr.mxu0 0.0
  %228 = vmatpush2.msra.mxu0 0.0
  %229 = vmatprep.subr.mxu0 0.0
  %230 = vmatpush2.msra.mxu0 0.0
  %231 = vmatprep.mubr.f32.mxu0 0.0
  %232 = vmatmul.mubr.f32.gmra.mxu0 %v68
  %v233 = vpop.f32.mrf.mxu0
  %v234 = vadd.f32 0.0, %v233
  %v235 = vpop.f32.mrf.mxu0
  %236 = vmatprep.mubr.f32.mxu0 0.0
  %237 = vmatmul.mubr.f32.gmra.mxu0 %v71
  %v238 = vpop.f32.mrf.mxu0
  %v239 = vadd.f32 0.0, %v238
  %v240 = vpop.f32.mrf.mxu0
  %241 = vmatprep.mubr.f32.mxu0 0.0
  %242 = vmatmul.mubr.f32.gmra.mxu0 %v74
  %v243 = vpop.f32.mrf.mxu0
  %v244 = vadd.f32 0.0, %v243
  %v245 = vpop.f32.mrf.mxu0
  %246 = vmatprep.mubr.f32.mxu0 0.0
  %247 = vmatmul.mubr.f32.gmra.mxu0 %v77
  %v248 = vpop.f32.mrf.mxu0
  %v249 = vadd.f32 0.0, %v248
  %v250 = vpop.f32.mrf.mxu0
  %251 = vmatprep.mubr.f32.mxu0 0.0
  %252 = vmatmul.mubr.f32.gmra.mxu0 %v80
  %v253 = vpop.f32.mrf.mxu0
  %v254 = vadd.f32 0.0, %v253
  %v255 = vpop.f32.mrf.mxu0
  %256 = vmatprep.mubr.f32.mxu0 0.0
  %257 = vmatmul.mubr.f32.gmra.mxu0 %v83
  %v258 = vpop.f32.mrf.mxu0
  %v259 = vadd.f32 0.0, %v258
  %v260 = vpop.f32.mrf.mxu0
  %261 = vmatprep.mubr.f32.mxu0 0.0
  %262 = vmatmul.mubr.f32.gmra.mxu0 %v86
  %v263 = vpop.f32.mrf.mxu0
  %v264 = vadd.f32 0.0, %v263
  %v265 = vpop.f32.mrf.mxu0
  %266 = vmatprep.mubr.f32.mxu0 0.0
  %267 = vmatmul.mubr.f32.gmra.mxu0 %v89
  %v268 = vpop.f32.mrf.mxu0
  %v269 = vadd.f32 0.0, %v268
  %v270 = vpop.f32.mrf.mxu0
  %271 = vmatprep.mubr.f32.mxu0 0.0
  %272 = vmatmul.mubr.f32.gmra.mxu0 %v92
  %v273 = vpop.f32.mrf.mxu0
  %v274 = vadd.f32 0.0, %v273
  %v275 = vpop.f32.mrf.mxu0
  %276 = vmatprep.mubr.f32.mxu0 0.0
  %277 = vmatmul.mubr.f32.gmra.mxu0 %v95
  %v278 = vpop.f32.mrf.mxu0
  %v279 = vadd.f32 0.0, %v278
  %v280 = vpop.f32.mrf.mxu0
  %281 = vmatprep.mubr.f32.mxu0 0.0
  %282 = vmatmul.mubr.f32.gmra.mxu0 %v98
  %v283 = vpop.f32.mrf.mxu0
  %v284 = vadd.f32 0.0, %v283
  %v285 = vpop.f32.mrf.mxu0
  %286 = vmatprep.mubr.f32.mxu0 0.0
  %287 = vmatmul.mubr.f32.gmra.mxu0 %v101
  %v288 = vpop.f32.mrf.mxu0
  %v289 = vadd.f32 0.0, %v288
  %v290 = vpop.f32.mrf.mxu0
  %291 = vmatprep.mubr.f32.mxu0 0.0
  %292 = vmatmul.mubr.f32.gmra.mxu0 %v104
  %v293 = vpop.f32.mrf.mxu0
  %v294 = vadd.f32 0.0, %v293
  %v295 = vpop.f32.mrf.mxu0
  %296 = vmatprep.mubr.f32.mxu0 0.0
  %297 = vmatmul.mubr.f32.gmra.mxu0 %v107
  %v298 = vpop.f32.mrf.mxu0
  %v299 = vadd.f32 0.0, %v298
  %v300 = vpop.f32.mrf.mxu0
  %301 = vmatprep.mubr.f32.mxu0 0.0
  %302 = vmatmul.mubr.f32.gmra.mxu0 %v110
  %v303 = vpop.f32.mrf.mxu0
  %v304 = vadd.f32 0.0, %v303
  %v305 = vpop.f32.mrf.mxu0
  %306 = vmatprep.mubr.f32.mxu0 0.0
  %307 = vmatmul.mubr.f32.gmra.mxu0 %v113
  %v308 = vpop.f32.mrf.mxu0
  %v309 = vadd.f32 0.0, %v308
  %v310 = vpop.f32.mrf.mxu0
  %311 = vmatprep.mubr.f32.mxu0 0.0
  %312 = vmatmul.mubr.f32.gmra.mxu0 %v116
  %v313 = vpop.f32.mrf.mxu0
  %v314 = vadd.f32 0.0, %v313
  %v315 = vpop.f32.mrf.mxu0
  %316 = vmatprep.mubr.f32.mxu0 0.0
  %317 = vmatmul.mubr.f32.gmra.mxu0 %v119
  %v318 = vpop.f32.mrf.mxu0
  %v319 = vadd.f32 0.0, %v318
  %v320 = vpop.f32.mrf.mxu0
  %321 = vmatprep.mubr.f32.mxu0 0.0
  %322 = vmatmul.mubr.f32.gmra.mxu0 %v122
  %v323 = vpop.f32.mrf.mxu0
  %v324 = vadd.f32 0.0, %v323
  %v325 = vpop.f32.mrf.mxu0
  %326 = vmatprep.mubr.f32.mxu0 0.0
  %327 = vmatmul.mubr.f32.gmra.mxu0 %v125
  %v328 = vpop.f32.mrf.mxu0
  %v329 = vadd.f32 0.0, %v328
  %v330 = vpop.f32.mrf.mxu0
  %331 = vmatprep.mubr.f32.mxu0 0.0
  %332 = vmatmul.mubr.f32.gmra.mxu0 %v128
  %v333 = vpop.f32.mrf.mxu0
  %v334 = vadd.f32 0.0, %v333
  %v335 = vpop.f32.mrf.mxu0
  %336 = vmatprep.mubr.f32.mxu0 0.0
  %337 = vmatmul.mubr.f32.gmra.mxu0 %v131
  %v338 = vpop.f32.mrf.mxu0
  %v339 = vadd.f32 0.0, %v338
  %v340 = vpop.f32.mrf.mxu0
  %341 = vmatprep.mubr.f32.mxu0 0.0
  %342 = vmatmul.mubr.f32.gmra.mxu0 %v134
  %v343 = vpop.f32.mrf.mxu0
  %v344 = vadd.f32 0.0, %v343
  %v345 = vpop.f32.mrf.mxu0
  %346 = vmatprep.mubr.f32.mxu0 0.0
  %347 = vmatmul.mubr.f32.gmra.mxu0 %v137
  %v348 = vpop.f32.mrf.mxu0
  %v349 = vadd.f32 0.0, %v348
  %v350 = vpop.f32.mrf.mxu0
  %351 = vmatprep.mubr.f32.mxu0 0.0
  %352 = vmatmul.mubr.f32.gmra.mxu0 %v140
  %v353 = vpop.f32.mrf.mxu0
  %v354 = vadd.f32 0.0, %v353
  %v355 = vpop.f32.mrf.mxu0
  %356 = vmatprep.mubr.f32.mxu0 0.0
  %357 = vmatmul.mubr.f32.gmra.mxu0 %v143
  %v358 = vpop.f32.mrf.mxu0
  %v359 = vadd.f32 0.0, %v358
  %v360 = vpop.f32.mrf.mxu0
  %361 = vmatprep.mubr.f32.mxu0 0.0
  %362 = vmatmul.mubr.f32.gmra.mxu0 %v146
  %v363 = vpop.f32.mrf.mxu0
  %v364 = vadd.f32 0.0, %v363
  %v365 = vpop.f32.mrf.mxu0
  %366 = vmatprep.mubr.f32.mxu0 0.0
  %367 = vmatmul.mubr.f32.gmra.mxu0 %v149
  %v368 = vpop.f32.mrf.mxu0
  %v369 = vadd.f32 0.0, %v368
  %v370 = vpop.f32.mrf.mxu0
  %371 = vmatprep.mubr.f32.mxu0 0.0
  %372 = vmatmul.mubr.f32.gmra.mxu0 %v152
  %v373 = vpop.f32.mrf.mxu0
  %v374 = vadd.f32 0.0, %v373
  %v375 = vpop.f32.mrf.mxu0
  %376 = vmatprep.mubr.f32.mxu0 0.0
  %377 = vmatmul.mubr.f32.gmra.mxu0 %v155
  %v378 = vpop.f32.mrf.mxu0
  %v379 = vadd.f32 0.0, %v378
  %v380 = vpop.f32.mrf.mxu0
  %381 = vmatprep.mubr.f32.mxu0 0.0
  %382 = vmatmul.mubr.f32.gmra.mxu0 %v158
  %v383 = vpop.f32.mrf.mxu0
  %v384 = vadd.f32 0.0, %v383
  %v385 = vpop.f32.mrf.mxu0
  %386 = vmatprep.mubr.f32.mxu0 0.0
  %387 = vmatmul.mubr.f32.gmra.mxu0 %v161
  %v388 = vpop.f32.mrf.mxu0
  %v389 = vadd.f32 0.0, %v388
  %v390 = vpop.f32.mrf.mxu0
  %391 = vdwg.mxu0
  %v392 = vlaneseq
  %v393 = vshrl.u32 %v392, 7
  %v394 = vsub.s32 0, %v393
  %v395 = vrot.slane %v56, %v394
  %vm396 = vcmask 64512
  %v398 = vsel %vm396, %v52, 0
  %v401 = vsel %vm396, %v53, 0
  %403 = vmatprep.subr.mxu0 0.0
  %404 = vmatpush1.msra.mxu0 0.0
  %405 = vmatprep.subr.mxu0 0.0
  %406 = vmatpush1.msra.mxu0 0.0
  %407 = vmatprep.subr.mxu0 0.0
  %408 = vmatpush1.msra.mxu0 0.0
  %409 = vmatprep.subr.mxu0 0.0
  %410 = vmatpush1.msra.mxu0 0.0
  %411 = vmatprep.subr.mxu0 0.0
  %412 = vmatpush1.msra.mxu0 0.0
  %413 = vmatprep.subr.mxu0 0.0
  %414 = vmatpush1.msra.mxu0 0.0
  %415 = vmatprep.subr.mxu0 0.0
  %416 = vmatpush1.msra.mxu0 0.0
  %417 = vmatprep.subr.mxu0 0.0
  %418 = vmatpush1.msra.mxu0 0.0
  %419 = vmatprep.subr.mxu0 0.0
  %420 = vmatpush1.msra.mxu0 0.0
  %421 = vmatprep.subr.mxu0 0.0
  %422 = vmatpush1.msra.mxu0 0.0
  %423 = vmatprep.subr.mxu0 0.0
  %424 = vmatpush1.msra.mxu0 0.0
  %425 = vmatprep.subr.mxu0 0.0
  %426 = vmatpush1.msra.mxu0 0.0
  %427 = vmatprep.subr.mxu0 0.0
  %428 = vmatpush1.msra.mxu0 0.0
  %429 = vmatprep.subr.mxu0 0.0
  %430 = vmatpush1.msra.mxu0 0.0
  %431 = vmatprep.subr.mxu0 0.0
  %432 = vmatpush1.msra.mxu0 0.0
  %433 = vmatprep.subr.mxu0 0.0
  %434 = vmatpush1.msra.mxu0 %v55
  %435 = vmatprep.subr.mxu0 0.0
  %436 = vmatpush2.msra.mxu0 0.0
  %437 = vmatprep.subr.mxu0 0.0
  %438 = vmatpush2.msra.mxu0 0.0
  %439 = vmatprep.subr.mxu0 0.0
  %440 = vmatpush2.msra.mxu0 0.0
  %441 = vmatprep.subr.mxu0 0.0
  %442 = vmatpush2.msra.mxu0 0.0
  %443 = vmatprep.subr.mxu0 0.0
  %444 = vmatpush2.msra.mxu0 0.0
  %445 = vmatprep.subr.mxu0 0.0
  %446 = vmatpush2.msra.mxu0 0.0
  %447 = vmatprep.subr.mxu0 0.0
  %448 = vmatpush2.msra.mxu0 0.0
  %449 = vmatprep.subr.mxu0 0.0
  %450 = vmatpush2.msra.mxu0 0.0
  %451 = vmatprep.subr.mxu0 0.0
  %452 = vmatpush2.msra.mxu0 0.0
  %453 = vmatprep.subr.mxu0 0.0
  %454 = vmatpush2.msra.mxu0 0.0
  %455 = vmatprep.subr.mxu0 0.0
  %456 = vmatpush2.msra.mxu0 0.0
  %457 = vmatprep.subr.mxu0 0.0
  %458 = vmatpush2.msra.mxu0 0.0
  %459 = vmatprep.subr.mxu0 0.0
  %460 = vmatpush2.msra.mxu0 0.0
  %461 = vmatprep.subr.mxu0 0.0
  %462 = vmatpush2.msra.mxu0 0.0
  %463 = vmatprep.subr.mxu0 0.0
  %464 = vmatpush2.msra.mxu0 0.0
  %465 = vmatprep.subr.mxu0 0.0
  %466 = vmatpush2.msra.mxu0 0.0
  %467 = vmatprep.mubr.f32.mxu0 0.0
  %468 = vmatmul.mubr.f32.gmra.mxu0 %v398
  %v469 = vpop.f32.mrf.mxu0
  %v470 = vadd.f32 %v395, %v469
  %v471 = vpop.f32.mrf.mxu0
  %472 = vmatprep.mubr.f32.mxu0 0.0
  %473 = vmatmul.mubr.f32.gmra.mxu0 %v401
  %v474 = vpop.f32.mrf.mxu0
  %v475 = vadd.f32 %v395, %v474
  %v476 = vpop.f32.mrf.mxu0
  %477 = vdwg.mxu0
  %v480 = vcombine.high %v470, %v470
  %v482 = vunpack.c.l.s4 1966171168
  %v483 = vunpack.c.0.s8 %v482
  %v484 = vlaneseq
  %v485 = vshrl.u32 %v484, 7
  %v486 = vsub.s32 %v483, %v485
  %v487 = vrot.slane %v470, %v486
  %v489 = vunpack.c.l.s4 1966171168
  %v490 = vunpack.c.0.s8 %v489
  %v491 = vlaneseq
  %v492 = vshrl.u32 %v491, 7
  %v493 = vsub.s32 %v490, %v492
  %v494 = vrot.slane %v480, %v493
  %v495 = vcombine.high %v487, %v487
  %v496 = vcombine.high %v494, %v494
  %v498 = vunpack.c.l.s4 1966171168
  %v499 = vunpack.c.0.s8 %v498
  %v500 = vlaneseq
  %v501 = vshrl.u32 %v500, 7
  %v502 = vsub.s32 %v499, %v501
  %v503 = vrot.slane %v487, %v502
  %v505 = vunpack.c.l.s4 1966171168
  %v506 = vunpack.c.0.s8 %v505
  %v507 = vlaneseq
  %v508 = vshrl.u32 %v507, 7
  %v509 = vsub.s32 %v506, %v508
  %v510 = vrot.slane %v494, %v509
  %v512 = vunpack.c.l.s4 1966171168
  %v513 = vunpack.c.0.s8 %v512
  %v514 = vlaneseq
  %v515 = vshrl.u32 %v514, 7
  %v516 = vsub.s32 %v513, %v515
  %v517 = vrot.slane %v495, %v516
  %v519 = vunpack.c.l.s4 1966171168
  %v520 = vunpack.c.0.s8 %v519
  %v521 = vlaneseq
  %v522 = vshrl.u32 %v521, 7
  %v523 = vsub.s32 %v520, %v522
  %v524 = vrot.slane %v496, %v523
  %v525 = vcombine.high %v503, %v503
  %v526 = vcombine.high %v510, %v510
  %v527 = vcombine.high %v517, %v517
  %v528 = vcombine.high %v524, %v524
  %v529 = vcombine.high %v475, %v475
  %v531 = vunpack.c.l.s4 1966171168
  %v532 = vunpack.c.0.s8 %v531
  %v533 = vlaneseq
  %v534 = vshrl.u32 %v533, 7
  %v535 = vsub.s32 %v532, %v534
  %v536 = vrot.slane %v475, %v535
  %v538 = vunpack.c.l.s4 1966171168
  %v539 = vunpack.c.0.s8 %v538
  %v540 = vlaneseq
  %v541 = vshrl.u32 %v540, 7
  %v542 = vsub.s32 %v539, %v541
  %v543 = vrot.slane %v529, %v542
  %v544 = vcombine.high %v536, %v536
  %v545 = vcombine.high %v543, %v543
  %v547 = vunpack.c.l.s4 1966171168
  %v548 = vunpack.c.0.s8 %v547
  %v549 = vlaneseq
  %v550 = vshrl.u32 %v549, 7
  %v551 = vsub.s32 %v548, %v550
  %v552 = vrot.slane %v536, %v551
  %v554 = vunpack.c.l.s4 1966171168
  %v555 = vunpack.c.0.s8 %v554
  %v556 = vlaneseq
  %v557 = vshrl.u32 %v556, 7
  %v558 = vsub.s32 %v555, %v557
  %v559 = vrot.slane %v543, %v558
  %v561 = vunpack.c.l.s4 1966171168
  %v562 = vunpack.c.0.s8 %v561
  %v563 = vlaneseq
  %v564 = vshrl.u32 %v563, 7
  %v565 = vsub.s32 %v562, %v564
  %v566 = vrot.slane %v544, %v565
  %v568 = vunpack.c.l.s4 1966171168
  %v569 = vunpack.c.0.s8 %v568
  %v570 = vlaneseq
  %v571 = vshrl.u32 %v570, 7
  %v572 = vsub.s32 %v569, %v571
  %v573 = vrot.slane %v545, %v572
  %v574 = vcombine.high %v552, %v552
  %v575 = vcombine.high %v559, %v559
  %v576 = vcombine.high %v566, %v566
  %v577 = vcombine.high %v573, %v573
  %v578 = vlaneseq
  %v579 = vshrl.u32 %v578, 7
  %v580 = vsub.s32 0, %v579
  %v581 = vrot.slane %v503, %v580
  %v582 = vlaneseq
  %v583 = vshrl.u32 %v582, 7
  %v584 = vsub.s32 0, %v583
  %v585 = vrot.slane %v517, %v584
  %v586 = vlaneseq
  %v587 = vshrl.u32 %v586, 7
  %v588 = vsub.s32 0, %v587
  %v589 = vrot.slane %v525, %v588
  %v590 = vlaneseq
  %v591 = vshrl.u32 %v590, 7
  %v592 = vsub.s32 0, %v591
  %v593 = vrot.slane %v527, %v592
  %v594 = vlaneseq
  %v595 = vshrl.u32 %v594, 7
  %v596 = vsub.s32 0, %v595
  %v597 = vrot.slane %v510, %v596
  %v598 = vlaneseq
  %v599 = vshrl.u32 %v598, 7
  %v600 = vsub.s32 0, %v599
  %v601 = vrot.slane %v524, %v600
  %v602 = vlaneseq
  %v603 = vshrl.u32 %v602, 7
  %v604 = vsub.s32 0, %v603
  %v605 = vrot.slane %v526, %v604
  %v606 = vlaneseq
  %v607 = vshrl.u32 %v606, 7
  %v608 = vsub.s32 0, %v607
  %v609 = vrot.slane %v528, %v608
  %v610 = vlaneseq
  %v611 = vshrl.u32 %v610, 7
  %v612 = vsub.s32 0, %v611
  %v613 = vrot.slane %v552, %v612
  %v614 = vlaneseq
  %v615 = vshrl.u32 %v614, 7
  %v616 = vsub.s32 0, %v615
  %v617 = vrot.slane %v566, %v616
  %v618 = vlaneseq
  %v619 = vshrl.u32 %v618, 7
  %v620 = vsub.s32 0, %v619
  %v621 = vrot.slane %v574, %v620
  %v622 = vlaneseq
  %v623 = vshrl.u32 %v622, 7
  %v624 = vsub.s32 0, %v623
  %v625 = vrot.slane %v576, %v624
  %v626 = vlaneseq
  %v627 = vshrl.u32 %v626, 7
  %v628 = vsub.s32 0, %v627
  %v629 = vrot.slane %v559, %v628
  %v630 = vlaneseq
  %v631 = vshrl.u32 %v630, 7
  %v632 = vsub.s32 0, %v631
  %v633 = vrot.slane %v573, %v632
  %v634 = vlaneseq
  %v635 = vshrl.u32 %v634, 7
  %v636 = vsub.s32 0, %v635
  %v637 = vrot.slane %v575, %v636
  %v638 = vlaneseq
  %v639 = vshrl.u32 %v638, 7
  %v640 = vsub.s32 0, %v639
  %v641 = vrot.slane %v577, %v640
  %v658 = vadd.f32 %v234, %v581
  %v659 = vadd.f32 %v239, %v581
  %v660 = vadd.f32 %v244, %v585
  %v661 = vadd.f32 %v249, %v585
  %v662 = vadd.f32 %v254, %v589
  %v663 = vadd.f32 %v259, %v589
  %v664 = vadd.f32 %v264, %v593
  %v665 = vadd.f32 %v269, %v593
  %v666 = vadd.f32 %v274, %v597
  %v667 = vadd.f32 %v279, %v597
  %v668 = vadd.f32 %v284, %v601
  %v669 = vadd.f32 %v289, %v601
  %v670 = vadd.f32 %v294, %v605
  %v671 = vadd.f32 %v299, %v605
  %v672 = vadd.f32 %v304, %v609
  %v673 = vadd.f32 %v309, %v609
  %v674 = vadd.f32 %v314, %v613
  %v675 = vadd.f32 %v319, %v613
  %v676 = vadd.f32 %v324, %v617
  %v677 = vadd.f32 %v329, %v617
  %v678 = vadd.f32 %v334, %v621
  %v679 = vadd.f32 %v339, %v621
  %v680 = vadd.f32 %v344, %v625
  %v681 = vadd.f32 %v349, %v625
  %v682 = vadd.f32 %v354, %v629
  %v683 = vadd.f32 %v359, %v629
  %v684 = vadd.f32 %v364, %v633
  %v685 = vadd.f32 %v369, %v633
  %v686 = vadd.f32 %v374, %v637
  %v687 = vadd.f32 %v379, %v637
  %v688 = vadd.f32 %v384, %v641
  %v689 = vadd.f32 %v389, %v641
  %v690 = vmax.f32 %v658, 0.0
  %v691 = vmax.f32 %v659, 0.0
  %v692 = vmax.f32 %v660, 0.0
  %v693 = vmax.f32 %v661, 0.0
  %v694 = vmax.f32 %v662, 0.0
  %v695 = vmax.f32 %v663, 0.0
  %v696 = vmax.f32 %v664, 0.0
  %v697 = vmax.f32 %v665, 0.0
  %v698 = vmax.f32 %v666, 0.0
  %v699 = vmax.f32 %v667, 0.0
  %v700 = vmax.f32 %v668, 0.0
  %v701 = vmax.f32 %v669, 0.0
  %v702 = vmax.f32 %v670, 0.0
  %v703 = vmax.f32 %v671, 0.0
  %v704 = vmax.f32 %v672, 0.0
  %v705 = vmax.f32 %v673, 0.0
  %v706 = vmax.f32 %v674, 0.0
  %v707 = vmax.f32 %v675, 0.0
  %v708 = vmax.f32 %v676, 0.0
  %v709 = vmax.f32 %v677, 0.0
  %v710 = vmax.f32 %v678, 0.0
  %v711 = vmax.f32 %v679, 0.0
  %v712 = vmax.f32 %v680, 0.0
  %v713 = vmax.f32 %v681, 0.0
  %v714 = vmax.f32 %v682, 0.0
  %v715 = vmax.f32 %v683, 0.0
  %v716 = vmax.f32 %v684, 0.0
  %v717 = vmax.f32 %v685, 0.0
  %v718 = vmax.f32 %v686, 0.0
  %v719 = vmax.f32 %v687, 0.0
  %v720 = vmax.f32 %v688, 0.0
  %v721 = vmax.f32 %v689, 0.0
  %v722 = vlaneseq
  %v723 = vshrl.u32 %v722, 7
  %v724 = vsub.s32 0, %v723
  %v725 = vrot.slane %v65, %v724
  %vm726 = vcmask 523264
  %v728 = vsel %vm726, %v690, 0
  %v731 = vsel %vm726, %v691, 0
  %v734 = vsel %vm726, %v692, 0
  %v737 = vsel %vm726, %v693, 0
  %v740 = vsel %vm726, %v694, 0
  %v743 = vsel %vm726, %v695, 0
  %v746 = vsel %vm726, %v696, 0
  %v749 = vsel %vm726, %v697, 0
  %v752 = vsel %vm726, %v698, 0
  %v755 = vsel %vm726, %v699, 0
  %v758 = vsel %vm726, %v700, 0
  %v761 = vsel %vm726, %v701, 0
  %v764 = vsel %vm726, %v702, 0
  %v767 = vsel %vm726, %v703, 0
  %v770 = vsel %vm726, %v704, 0
  %v773 = vsel %vm726, %v705, 0
  %v776 = vsel %vm726, %v706, 0
  %v779 = vsel %vm726, %v707, 0
  %v782 = vsel %vm726, %v708, 0
  %v785 = vsel %vm726, %v709, 0
  %v788 = vsel %vm726, %v710, 0
  %v791 = vsel %vm726, %v711, 0
  %v794 = vsel %vm726, %v712, 0
  %v797 = vsel %vm726, %v713, 0
  %v800 = vsel %vm726, %v714, 0
  %v803 = vsel %vm726, %v715, 0
  %v806 = vsel %vm726, %v716, 0
  %v809 = vsel %vm726, %v717, 0
  %v812 = vsel %vm726, %v718, 0
  %v815 = vsel %vm726, %v719, 0
  %v818 = vsel %vm726, %v720, 0
  %v821 = vsel %vm726, %v721, 0
  %823 = vmatprep.subr.mxu0 0.0
  %824 = vmatpush1.msra.mxu0 0.0
  %825 = vmatprep.subr.mxu0 0.0
  %826 = vmatpush1.msra.mxu0 0.0
  %827 = vmatprep.subr.mxu0 0.0
  %828 = vmatpush1.msra.mxu0 0.0
  %829 = vmatprep.subr.mxu0 0.0
  %830 = vmatpush1.msra.mxu0 0.0
  %831 = vmatprep.subr.mxu0 0.0
  %832 = vmatpush1.msra.mxu0 0.0
  %833 = vmatprep.subr.mxu0 0.0
  %834 = vmatpush1.msra.mxu0 0.0
  %835 = vmatprep.subr.mxu0 0.0
  %836 = vmatpush1.msra.mxu0 0.0
  %837 = vmatprep.subr.mxu0 0.0
  %838 = vmatpush1.msra.mxu0 0.0
  %839 = vmatprep.subr.mxu0 0.0
  %840 = vmatpush1.msra.mxu0 %v64
  %841 = vmatprep.subr.mxu0 0.0
  %842 = vmatpush1.msra.mxu0 %v63
  %843 = vmatprep.subr.mxu0 0.0
  %844 = vmatpush1.msra.mxu0 %v62
  %845 = vmatprep.subr.mxu0 0.0
  %846 = vmatpush1.msra.mxu0 %v61
  %847 = vmatprep.subr.mxu0 0.0
  %848 = vmatpush1.msra.mxu0 %v60
  %849 = vmatprep.subr.mxu0 0.0
  %850 = vmatpush1.msra.mxu0 %v59
  %851 = vmatprep.subr.mxu0 0.0
  %852 = vmatpush1.msra.mxu0 %v58
  %853 = vmatprep.subr.mxu0 0.0
  %854 = vmatpush1.msra.mxu0 %v57
  %855 = vmatprep.subr.mxu0 0.0
  %856 = vmatpush2.msra.mxu0 0.0
  %857 = vmatprep.subr.mxu0 0.0
  %858 = vmatpush2.msra.mxu0 0.0
  %859 = vmatprep.subr.mxu0 0.0
  %860 = vmatpush2.msra.mxu0 0.0
  %861 = vmatprep.subr.mxu0 0.0
  %862 = vmatpush2.msra.mxu0 0.0
  %863 = vmatprep.subr.mxu0 0.0
  %864 = vmatpush2.msra.mxu0 0.0
  %865 = vmatprep.subr.mxu0 0.0
  %866 = vmatpush2.msra.mxu0 0.0
  %867 = vmatprep.subr.mxu0 0.0
  %868 = vmatpush2.msra.mxu0 0.0
  %869 = vmatprep.subr.mxu0 0.0
  %870 = vmatpush2.msra.mxu0 0.0
  %871 = vmatprep.subr.mxu0 0.0
  %872 = vmatpush2.msra.mxu0 0.0
  %873 = vmatprep.subr.mxu0 0.0
  %874 = vmatpush2.msra.mxu0 0.0
  %875 = vmatprep.subr.mxu0 0.0
  %876 = vmatpush2.msra.mxu0 0.0
  %877 = vmatprep.subr.mxu0 0.0
  %878 = vmatpush2.msra.mxu0 0.0
  %879 = vmatprep.subr.mxu0 0.0
  %880 = vmatpush2.msra.mxu0 0.0
  %881 = vmatprep.subr.mxu0 0.0
  %882 = vmatpush2.msra.mxu0 0.0
  %883 = vmatprep.subr.mxu0 0.0
  %884 = vmatpush2.msra.mxu0 0.0
  %885 = vmatprep.subr.mxu0 0.0
  %886 = vmatpush2.msra.mxu0 0.0
  %887 = vmatprep.mubr.f32.mxu0 0.0
  %888 = vmatmul.mubr.f32.gmra.mxu0 %v728
  %v889 = vpop.f32.mrf.mxu0
  %v890 = vadd.f32 %v725, %v889
  %v891 = vpop.f32.mrf.mxu0
  %892 = vmatprep.mubr.f32.mxu0 0.0
  %893 = vmatmul.mubr.f32.gmra.mxu0 %v731
  %v894 = vpop.f32.mrf.mxu0
  %v895 = vadd.f32 %v725, %v894
  %v896 = vpop.f32.mrf.mxu0
  %897 = vmatprep.mubr.f32.mxu0 0.0
  %898 = vmatmul.mubr.f32.gmra.mxu0 %v734
  %v899 = vpop.f32.mrf.mxu0
  %v900 = vadd.f32 %v725, %v899
  %v901 = vpop.f32.mrf.mxu0
  %902 = vmatprep.mubr.f32.mxu0 0.0
  %903 = vmatmul.mubr.f32.gmra.mxu0 %v737
  %v904 = vpop.f32.mrf.mxu0
  %v905 = vadd.f32 %v725, %v904
  %v906 = vpop.f32.mrf.mxu0
  %907 = vmatprep.mubr.f32.mxu0 0.0
  %908 = vmatmul.mubr.f32.gmra.mxu0 %v740
  %v909 = vpop.f32.mrf.mxu0
  %v910 = vadd.f32 %v725, %v909
  %v911 = vpop.f32.mrf.mxu0
  %912 = vmatprep.mubr.f32.mxu0 0.0
  %913 = vmatmul.mubr.f32.gmra.mxu0 %v743
  %v914 = vpop.f32.mrf.mxu0
  %v915 = vadd.f32 %v725, %v914
  %v916 = vpop.f32.mrf.mxu0
  %917 = vmatprep.mubr.f32.mxu0 0.0
  %918 = vmatmul.mubr.f32.gmra.mxu0 %v746
  %v919 = vpop.f32.mrf.mxu0
  %v920 = vadd.f32 %v725, %v919
  %v921 = vpop.f32.mrf.mxu0
  %922 = vmatprep.mubr.f32.mxu0 0.0
  %923 = vmatmul.mubr.f32.gmra.mxu0 %v749
  %v924 = vpop.f32.mrf.mxu0
  %v925 = vadd.f32 %v725, %v924
  %v926 = vpop.f32.mrf.mxu0
  %927 = vmatprep.mubr.f32.mxu0 0.0
  %928 = vmatmul.mubr.f32.gmra.mxu0 %v752
  %v929 = vpop.f32.mrf.mxu0
  %v930 = vadd.f32 %v725, %v929
  %v931 = vpop.f32.mrf.mxu0
  %932 = vmatprep.mubr.f32.mxu0 0.0
  %933 = vmatmul.mubr.f32.gmra.mxu0 %v755
  %v934 = vpop.f32.mrf.mxu0
  %v935 = vadd.f32 %v725, %v934
  %v936 = vpop.f32.mrf.mxu0
  %937 = vmatprep.mubr.f32.mxu0 0.0
  %938 = vmatmul.mubr.f32.gmra.mxu0 %v758
  %v939 = vpop.f32.mrf.mxu0
  %v940 = vadd.f32 %v725, %v939
  %v941 = vpop.f32.mrf.mxu0
  %942 = vmatprep.mubr.f32.mxu0 0.0
  %943 = vmatmul.mubr.f32.gmra.mxu0 %v761
  %v944 = vpop.f32.mrf.mxu0
  %v945 = vadd.f32 %v725, %v944
  %v946 = vpop.f32.mrf.mxu0
  %947 = vmatprep.mubr.f32.mxu0 0.0
  %948 = vmatmul.mubr.f32.gmra.mxu0 %v764
  %v949 = vpop.f32.mrf.mxu0
  %v950 = vadd.f32 %v725, %v949
  %v951 = vpop.f32.mrf.mxu0
  %952 = vmatprep.mubr.f32.mxu0 0.0
  %953 = vmatmul.mubr.f32.gmra.mxu0 %v767
  %v954 = vpop.f32.mrf.mxu0
  %v955 = vadd.f32 %v725, %v954
  %v956 = vpop.f32.mrf.mxu0
  %957 = vmatprep.mubr.f32.mxu0 0.0
  %958 = vmatmul.mubr.f32.gmra.mxu0 %v770
  %v959 = vpop.f32.mrf.mxu0
  %v960 = vadd.f32 %v725, %v959
  %v961 = vpop.f32.mrf.mxu0
  %962 = vmatprep.mubr.f32.mxu0 0.0
  %963 = vmatmul.mubr.f32.gmra.mxu0 %v773
  %v964 = vpop.f32.mrf.mxu0
  %v965 = vadd.f32 %v725, %v964
  %v966 = vpop.f32.mrf.mxu0
  %967 = vmatprep.mubr.f32.mxu0 0.0
  %968 = vmatmul.mubr.f32.gmra.mxu0 %v776
  %v969 = vpop.f32.mrf.mxu0
  %v970 = vadd.f32 %v725, %v969
  %v971 = vpop.f32.mrf.mxu0
  %972 = vmatprep.mubr.f32.mxu0 0.0
  %973 = vmatmul.mubr.f32.gmra.mxu0 %v779
  %v974 = vpop.f32.mrf.mxu0
  %v975 = vadd.f32 %v725, %v974
  %v976 = vpop.f32.mrf.mxu0
  %977 = vmatprep.mubr.f32.mxu0 0.0
  %978 = vmatmul.mubr.f32.gmra.mxu0 %v782
  %v979 = vpop.f32.mrf.mxu0
  %v980 = vadd.f32 %v725, %v979
  %v981 = vpop.f32.mrf.mxu0
  %982 = vmatprep.mubr.f32.mxu0 0.0
  %983 = vmatmul.mubr.f32.gmra.mxu0 %v785
  %v984 = vpop.f32.mrf.mxu0
  %v985 = vadd.f32 %v725, %v984
  %v986 = vpop.f32.mrf.mxu0
  %987 = vmatprep.mubr.f32.mxu0 0.0
  %988 = vmatmul.mubr.f32.gmra.mxu0 %v788
  %v989 = vpop.f32.mrf.mxu0
  %v990 = vadd.f32 %v725, %v989
  %v991 = vpop.f32.mrf.mxu0
  %992 = vmatprep.mubr.f32.mxu0 0.0
  %993 = vmatmul.mubr.f32.gmra.mxu0 %v791
  %v994 = vpop.f32.mrf.mxu0
  %v995 = vadd.f32 %v725, %v994
  %v996 = vpop.f32.mrf.mxu0
  %997 = vmatprep.mubr.f32.mxu0 0.0
  %998 = vmatmul.mubr.f32.gmra.mxu0 %v794
  %v999 = vpop.f32.mrf.mxu0
  %v1000 = vadd.f32 %v725, %v999
  %v1001 = vpop.f32.mrf.mxu0
  %1002 = vmatprep.mubr.f32.mxu0 0.0
  %1003 = vmatmul.mubr.f32.gmra.mxu0 %v797
  %v1004 = vpop.f32.mrf.mxu0
  %v1005 = vadd.f32 %v725, %v1004
  %v1006 = vpop.f32.mrf.mxu0
  %1007 = vmatprep.mubr.f32.mxu0 0.0
  %1008 = vmatmul.mubr.f32.gmra.mxu0 %v800
  %v1009 = vpop.f32.mrf.mxu0
  %v1010 = vadd.f32 %v725, %v1009
  %v1011 = vpop.f32.mrf.mxu0
  %1012 = vmatprep.mubr.f32.mxu0 0.0
  %1013 = vmatmul.mubr.f32.gmra.mxu0 %v803
  %v1014 = vpop.f32.mrf.mxu0
  %v1015 = vadd.f32 %v725, %v1014
  %v1016 = vpop.f32.mrf.mxu0
  %1017 = vmatprep.mubr.f32.mxu0 0.0
  %1018 = vmatmul.mubr.f32.gmra.mxu0 %v806
  %v1019 = vpop.f32.mrf.mxu0
  %v1020 = vadd.f32 %v725, %v1019
  %v1021 = vpop.f32.mrf.mxu0
  %1022 = vmatprep.mubr.f32.mxu0 0.0
  %1023 = vmatmul.mubr.f32.gmra.mxu0 %v809
  %v1024 = vpop.f32.mrf.mxu0
  %v1025 = vadd.f32 %v725, %v1024
  %v1026 = vpop.f32.mrf.mxu0
  %1027 = vmatprep.mubr.f32.mxu0 0.0
  %1028 = vmatmul.mubr.f32.gmra.mxu0 %v812
  %v1029 = vpop.f32.mrf.mxu0
  %v1030 = vadd.f32 %v725, %v1029
  %v1031 = vpop.f32.mrf.mxu0
  %1032 = vmatprep.mubr.f32.mxu0 0.0
  %1033 = vmatmul.mubr.f32.gmra.mxu0 %v815
  %v1034 = vpop.f32.mrf.mxu0
  %v1035 = vadd.f32 %v725, %v1034
  %v1036 = vpop.f32.mrf.mxu0
  %1037 = vmatprep.mubr.f32.mxu0 0.0
  %1038 = vmatmul.mubr.f32.gmra.mxu0 %v818
  %v1039 = vpop.f32.mrf.mxu0
  %v1040 = vadd.f32 %v725, %v1039
  %v1041 = vpop.f32.mrf.mxu0
  %1042 = vmatprep.mubr.f32.mxu0 0.0
  %1043 = vmatmul.mubr.f32.gmra.mxu0 %v821
  %v1044 = vpop.f32.mrf.mxu0
  %v1045 = vadd.f32 %v725, %v1044
  %v1046 = vpop.f32.mrf.mxu0
  %1047 = vdwg.mxu0
  %v1048 = vmax.f32 %v890, 0.0
  %v1049 = vmax.f32 %v895, 0.0
  %v1050 = vmax.f32 %v900, 0.0
  %v1051 = vmax.f32 %v905, 0.0
  %v1052 = vmax.f32 %v910, 0.0
  %v1053 = vmax.f32 %v915, 0.0
  %v1054 = vmax.f32 %v920, 0.0
  %v1055 = vmax.f32 %v925, 0.0
  %v1056 = vmax.f32 %v930, 0.0
  %v1057 = vmax.f32 %v935, 0.0
  %v1058 = vmax.f32 %v940, 0.0
  %v1059 = vmax.f32 %v945, 0.0
  %v1060 = vmax.f32 %v950, 0.0
  %v1061 = vmax.f32 %v955, 0.0
  %v1062 = vmax.f32 %v960, 0.0
  %v1063 = vmax.f32 %v965, 0.0
  %v1064 = vmax.f32 %v970, 0.0
  %v1065 = vmax.f32 %v975, 0.0
  %v1066 = vmax.f32 %v980, 0.0
  %v1067 = vmax.f32 %v985, 0.0
  %v1068 = vmax.f32 %v990, 0.0
  %v1069 = vmax.f32 %v995, 0.0
  %v1070 = vmax.f32 %v1000, 0.0
  %v1071 = vmax.f32 %v1005, 0.0
  %v1072 = vmax.f32 %v1010, 0.0
  %v1073 = vmax.f32 %v1015, 0.0
  %v1074 = vmax.f32 %v1020, 0.0
  %v1075 = vmax.f32 %v1025, 0.0
  %v1076 = vmax.f32 %v1030, 0.0
  %v1077 = vmax.f32 %v1035, 0.0
  %v1078 = vmax.f32 %v1040, 0.0
  %v1079 = vmax.f32 %v1045, 0.0
  %vm1080 = vcmask 261120
  %v1081 = vsel %vm1080, %v1048, -inf
  %v1082 = vsel %vm1080, %v1049, -inf
  %v1083 = vmax.f32 %v1081, %v1082
  %v1084 = vrot.slane %v1083, 4
  %v1085 = vmax.f32 %v1083, %v1084
  %v1086 = vrot.slane %v1085, 2
  %v1087 = vmax.f32 %v1085, %v1086
  %v1088 = vrot.slane %v1087, 1
  %v1089 = vmax.f32 %v1087, %v1088
  %v1090 = vsel %vm1080, %v1050, -inf
  %v1091 = vsel %vm1080, %v1051, -inf
  %v1092 = vmax.f32 %v1090, %v1091
  %v1093 = vrot.slane %v1092, 4
  %v1094 = vmax.f32 %v1092, %v1093
  %v1095 = vrot.slane %v1094, 2
  %v1096 = vmax.f32 %v1094, %v1095
  %v1097 = vrot.slane %v1096, 1
  %v1098 = vmax.f32 %v1096, %v1097
  %v1099 = vsel %vm1080, %v1052, -inf
  %v1100 = vsel %vm1080, %v1053, -inf
  %v1101 = vmax.f32 %v1099, %v1100
  %v1102 = vrot.slane %v1101, 4
  %v1103 = vmax.f32 %v1101, %v1102
  %v1104 = vrot.slane %v1103, 2
  %v1105 = vmax.f32 %v1103, %v1104
  %v1106 = vrot.slane %v1105, 1
  %v1107 = vmax.f32 %v1105, %v1106
  %v1108 = vsel %vm1080, %v1054, -inf
  %v1109 = vsel %vm1080, %v1055, -inf
  %v1110 = vmax.f32 %v1108, %v1109
  %v1111 = vrot.slane %v1110, 4
  %v1112 = vmax.f32 %v1110, %v1111
  %v1113 = vrot.slane %v1112, 2
  %v1114 = vmax.f32 %v1112, %v1113
  %v1115 = vrot.slane %v1114, 1
  %v1116 = vmax.f32 %v1114, %v1115
  %v1117 = vsel %vm1080, %v1056, -inf
  %v1118 = vsel %vm1080, %v1057, -inf
  %v1119 = vmax.f32 %v1117, %v1118
  %v1120 = vrot.slane %v1119, 4
  %v1121 = vmax.f32 %v1119, %v1120
  %v1122 = vrot.slane %v1121, 2
  %v1123 = vmax.f32 %v1121, %v1122
  %v1124 = vrot.slane %v1123, 1
  %v1125 = vmax.f32 %v1123, %v1124
  %v1126 = vsel %vm1080, %v1058, -inf
  %v1127 = vsel %vm1080, %v1059, -inf
  %v1128 = vmax.f32 %v1126, %v1127
  %v1129 = vrot.slane %v1128, 4
  %v1130 = vmax.f32 %v1128, %v1129
  %v1131 = vrot.slane %v1130, 2
  %v1132 = vmax.f32 %v1130, %v1131
  %v1133 = vrot.slane %v1132, 1
  %v1134 = vmax.f32 %v1132, %v1133
  %v1135 = vsel %vm1080, %v1060, -inf
  %v1136 = vsel %vm1080, %v1061, -inf
  %v1137 = vmax.f32 %v1135, %v1136
  %v1138 = vrot.slane %v1137, 4
  %v1139 = vmax.f32 %v1137, %v1138
  %v1140 = vrot.slane %v1139, 2
  %v1141 = vmax.f32 %v1139, %v1140
  %v1142 = vrot.slane %v1141, 1
  %v1143 = vmax.f32 %v1141, %v1142
  %v1144 = vsel %vm1080, %v1062, -inf
  %v1145 = vsel %vm1080, %v1063, -inf
  %v1146 = vmax.f32 %v1144, %v1145
  %v1147 = vrot.slane %v1146, 4
  %v1148 = vmax.f32 %v1146, %v1147
  %v1149 = vrot.slane %v1148, 2
  %v1150 = vmax.f32 %v1148, %v1149
  %v1151 = vrot.slane %v1150, 1
  %v1152 = vmax.f32 %v1150, %v1151
  %v1153 = vsel %vm1080, %v1064, -inf
  %v1154 = vsel %vm1080, %v1065, -inf
  %v1155 = vmax.f32 %v1153, %v1154
  %v1156 = vrot.slane %v1155, 4
  %v1157 = vmax.f32 %v1155, %v1156
  %v1158 = vrot.slane %v1157, 2
  %v1159 = vmax.f32 %v1157, %v1158
  %v1160 = vrot.slane %v1159, 1
  %v1161 = vmax.f32 %v1159, %v1160
  %v1162 = vsel %vm1080, %v1066, -inf
  %v1163 = vsel %vm1080, %v1067, -inf
  %v1164 = vmax.f32 %v1162, %v1163
  %v1165 = vrot.slane %v1164, 4
  %v1166 = vmax.f32 %v1164, %v1165
  %v1167 = vrot.slane %v1166, 2
  %v1168 = vmax.f32 %v1166, %v1167
  %v1169 = vrot.slane %v1168, 1
  %v1170 = vmax.f32 %v1168, %v1169
  %v1171 = vsel %vm1080, %v1068, -inf
  %v1172 = vsel %vm1080, %v1069, -inf
  %v1173 = vmax.f32 %v1171, %v1172
  %v1174 = vrot.slane %v1173, 4
  %v1175 = vmax.f32 %v1173, %v1174
  %v1176 = vrot.slane %v1175, 2
  %v1177 = vmax.f32 %v1175, %v1176
  %v1178 = vrot.slane %v1177, 1
  %v1179 = vmax.f32 %v1177, %v1178
  %v1180 = vsel %vm1080, %v1070, -inf
  %v1181 = vsel %vm1080, %v1071, -inf
  %v1182 = vmax.f32 %v1180, %v1181
  %v1183 = vrot.slane %v1182, 4
  %v1184 = vmax.f32 %v1182, %v1183
  %v1185 = vrot.slane %v1184, 2
  %v1186 = vmax.f32 %v1184, %v1185
  %v1187 = vrot.slane %v1186, 1
  %v1188 = vmax.f32 %v1186, %v1187
  %v1189 = vsel %vm1080, %v1072, -inf
  %v1190 = vsel %vm1080, %v1073, -inf
  %v1191 = vmax.f32 %v1189, %v1190
  %v1192 = vrot.slane %v1191, 4
  %v1193 = vmax.f32 %v1191, %v1192
  %v1194 = vrot.slane %v1193, 2
  %v1195 = vmax.f32 %v1193, %v1194
  %v1196 = vrot.slane %v1195, 1
  %v1197 = vmax.f32 %v1195, %v1196
  %v1198 = vsel %vm1080, %v1074, -inf
  %v1199 = vsel %vm1080, %v1075, -inf
  %v1200 = vmax.f32 %v1198, %v1199
  %v1201 = vrot.slane %v1200, 4
  %v1202 = vmax.f32 %v1200, %v1201
  %v1203 = vrot.slane %v1202, 2
  %v1204 = vmax.f32 %v1202, %v1203
  %v1205 = vrot.slane %v1204, 1
  %v1206 = vmax.f32 %v1204, %v1205
  %v1207 = vsel %vm1080, %v1076, -inf
  %v1208 = vsel %vm1080, %v1077, -inf
  %v1209 = vmax.f32 %v1207, %v1208
  %v1210 = vrot.slane %v1209, 4
  %v1211 = vmax.f32 %v1209, %v1210
  %v1212 = vrot.slane %v1211, 2
  %v1213 = vmax.f32 %v1211, %v1212
  %v1214 = vrot.slane %v1213, 1
  %v1215 = vmax.f32 %v1213, %v1214
  %v1216 = vsel %vm1080, %v1078, -inf
  %v1217 = vsel %vm1080, %v1079, -inf
  %v1218 = vmax.f32 %v1216, %v1217
  %v1219 = vrot.slane %v1218, 4
  %v1220 = vmax.f32 %v1218, %v1219
  %v1221 = vrot.slane %v1220, 2
  %v1222 = vmax.f32 %v1220, %v1221
  %v1223 = vrot.slane %v1222, 1
  %v1224 = vmax.f32 %v1222, %v1223
  %v1225 = vsel %vm396, %v52, 0.0
  %1226 = vadd.xlane.f32.xlu0 %v1225
  %v1227 = vpop.xlane.xlu0 %1226
  %v1228 = vsel %vm396, %v53, 0.0
  %1229 = vadd.xlane.f32.xlu0 %v1228
  %v1230 = vpop.xlane.xlu0 %1229
  %vm1231 = vcmp.eq.f32.partialorder %v1227, 0.0
  %vm1232 = vcmp.eq.f32.partialorder %v1230, 0.0
  %v1233 = vld [vmem:[%s3 + $0x90] sm:$0xff]
  %v1234 = vld [vmem:[%s3 + $0x98] sm:$0xff]
  %v1235 = vsel %vm1231, 1, 0
  %v1236 = vsel %vm1232, 1, 0
  %vm1237 = vcmp.eq.s32.totalorder %v1235, 1
  %vm1238 = vcmp.eq.s32.totalorder %v1236, 1
  %vm1255 = vcmask 1041409
  %v1256 = vsel %vm1255, %v1098, %v1089
  %vm1257 = vcmask 1042434
  %v1258 = vsel %vm1257, %v1107, %v1256
  %vm1259 = vcmask 1043459
  %v1260 = vsel %vm1259, %v1116, %v1258
  %vm1261 = vcmask 1044484
  %v1262 = vsel %vm1261, %v1125, %v1260
  %vm1263 = vcmask 1045509
  %v1264 = vsel %vm1263, %v1134, %v1262
  %vm1265 = vcmask 1046534
  %v1266 = vsel %vm1265, %v1143, %v1264
  %vm1267 = vcmask 1047559
  %v1268 = vsel %vm1267, %v1152, %v1266
  %v1269 = vsel %vm1255, %v1170, %v1161
  %v1270 = vsel %vm1257, %v1179, %v1269
  %v1271 = vsel %vm1259, %v1188, %v1270
  %v1272 = vsel %vm1261, %v1197, %v1271
  %v1273 = vsel %vm1263, %v1206, %v1272
  %v1274 = vsel %vm1265, %v1215, %v1273
  %v1275 = vsel %vm1267, %v1224, %v1274
  %v1278 = vsel %vm1237, 0.0, %v1268
  %v1279 = vsel %vm1238, 0.0, %v1275
  %v1280 = vadd.f32 %v1278, %v1233
  %v1281 = vadd.f32 %v1279, %v1234
  %v1282 = vld [vmem:[%s3 + $0x40] sm:$0xff]
  %v1283 = vld [vmem:[%s3 + $0x48] sm:$0xff]
  %v1284 = vld [vmem:[%s3 + $0x50] sm:$0xff]
  %v1285 = vld [vmem:[%s3 + $0x58] sm:$0xff]
  %v1286 = vld [vmem:[%s3 + $0x60] sm:$0xff]
  %v1287 = vld [vmem:[%s3 + $0x68] sm:$0xff]
  %v1288 = vld [vmem:[%s3 + $0x70] sm:$0xff]
  %v1289 = vld [vmem:[%s3 + $0x78] sm:$0xff]
  %v1290 = vld [vmem:[%s3 + $0x88] sm:$0x1]
  %v1291 = vsel %vm1080, %v1280, -inf
  %v1292 = vrot.slane %v1291, 4
  %v1293 = vmax.f32 %v1291, %v1292
  %v1294 = vrot.slane %v1293, 2
  %v1295 = vmax.f32 %v1293, %v1294
  %v1296 = vrot.slane %v1295, 1
  %v1297 = vmax.f32 %v1295, %v1296
  %v1298 = vsel %vm1080, %v1281, -inf
  %v1299 = vrot.slane %v1298, 4
  %v1300 = vmax.f32 %v1298, %v1299
  %v1301 = vrot.slane %v1300, 2
  %v1302 = vmax.f32 %v1300, %v1301
  %v1303 = vrot.slane %v1302, 1
  %v1304 = vmax.f32 %v1302, %v1303
  %v1307 = vsel %vm1255, %v1304, %v1297
  %v1308 = vsel %vm1080, %v1307, 0
  %1310 = vmatprep.subr.mxu0 0.0
  %1311 = vmatpush1.msra.mxu0 0.0
  %1312 = vmatprep.subr.mxu0 0.0
  %1313 = vmatpush1.msra.mxu0 0.0
  %1314 = vmatprep.subr.mxu0 0.0
  %1315 = vmatpush1.msra.mxu0 0.0
  %1316 = vmatprep.subr.mxu0 0.0
  %1317 = vmatpush1.msra.mxu0 0.0
  %1318 = vmatprep.subr.mxu0 0.0
  %1319 = vmatpush1.msra.mxu0 0.0
  %1320 = vmatprep.subr.mxu0 0.0
  %1321 = vmatpush1.msra.mxu0 0.0
  %1322 = vmatprep.subr.mxu0 0.0
  %1323 = vmatpush1.msra.mxu0 0.0
  %1324 = vmatprep.subr.mxu0 0.0
  %1325 = vmatpush1.msra.mxu0 0.0
  %1326 = vmatprep.subr.mxu0 0.0
  %1327 = vmatpush1.msra.mxu0 0.0
  %1328 = vmatprep.subr.mxu0 0.0
  %1329 = vmatpush1.msra.mxu0 0.0
  %1330 = vmatprep.subr.mxu0 0.0
  %1331 = vmatpush1.msra.mxu0 0.0
  %1332 = vmatprep.subr.mxu0 0.0
  %1333 = vmatpush1.msra.mxu0 0.0
  %1334 = vmatprep.subr.mxu0 0.0
  %1335 = vmatpush1.msra.mxu0 %v1289
  %1336 = vmatprep.subr.mxu0 0.0
  %1337 = vmatpush1.msra.mxu0 %v1288
  %1338 = vmatprep.subr.mxu0 0.0
  %1339 = vmatpush1.msra.mxu0 %v1287
  %1340 = vmatprep.subr.mxu0 0.0
  %1341 = vmatpush1.msra.mxu0 %v1286
  %1342 = vmatprep.subr.mxu0 0.0
  %1343 = vmatpush2.msra.mxu0 0.0
  %1344 = vmatprep.subr.mxu0 0.0
  %1345 = vmatpush2.msra.mxu0 0.0
  %1346 = vmatprep.subr.mxu0 0.0
  %1347 = vmatpush2.msra.mxu0 0.0
  %1348 = vmatprep.subr.mxu0 0.0
  %1349 = vmatpush2.msra.mxu0 0.0
  %1350 = vmatprep.subr.mxu0 0.0
  %1351 = vmatpush2.msra.mxu0 0.0
  %1352 = vmatprep.subr.mxu0 0.0
  %1353 = vmatpush2.msra.mxu0 0.0
  %1354 = vmatprep.subr.mxu0 0.0
  %1355 = vmatpush2.msra.mxu0 0.0
  %1356 = vmatprep.subr.mxu0 0.0
  %1357 = vmatpush2.msra.mxu0 0.0
  %1358 = vmatprep.subr.mxu0 0.0
  %1359 = vmatpush2.msra.mxu0 0.0
  %1360 = vmatprep.subr.mxu0 0.0
  %1361 = vmatpush2.msra.mxu0 0.0
  %1362 = vmatprep.subr.mxu0 0.0
  %1363 = vmatpush2.msra.mxu0 0.0
  %1364 = vmatprep.subr.mxu0 0.0
  %1365 = vmatpush2.msra.mxu0 0.0
  %1366 = vmatprep.subr.mxu0 0.0
  %1367 = vmatpush2.msra.mxu0 0.0
  %1368 = vmatprep.subr.mxu0 0.0
  %1369 = vmatpush2.msra.mxu0 0.0
  %1370 = vmatprep.subr.mxu0 0.0
  %1371 = vmatpush2.msra.mxu0 0.0
  %1372 = vmatprep.subr.mxu0 0.0
  %1373 = vmatpush2.msra.mxu0 0.0
  %1374 = vmatprep.mubr.f32.mxu0 0.0
  %1375 = vmatmul.mubr.f32.gmra.mxu0 %v1308
  %v1376 = vpop.f32.mrf.mxu0
  %v1377 = vadd.f32 0.0, %v1376
  %v1378 = vpop.f32.mrf.mxu0
  %1379 = vdwg.mxu0
  %v1380 = vlaneseq
  %v1381 = vshrl.u32 %v1380, 7
  %v1382 = vsub.s32 0, %v1381
  %v1383 = vrot.slane %v1290, %v1382
  %v1385 = vsel %vm1080, %v1280, 0
  %v1388 = vsel %vm1080, %v1281, 0
  %1390 = vmatprep.subr.mxu0 0.0
  %1391 = vmatpush1.msra.mxu0 0.0
  %1392 = vmatprep.subr.mxu0 0.0
  %1393 = vmatpush1.msra.mxu0 0.0
  %1394 = vmatprep.subr.mxu0 0.0
  %1395 = vmatpush1.msra.mxu0 0.0
  %1396 = vmatprep.subr.mxu0 0.0
  %1397 = vmatpush1.msra.mxu0 0.0
  %1398 = vmatprep.subr.mxu0 0.0
  %1399 = vmatpush1.msra.mxu0 0.0
  %1400 = vmatprep.subr.mxu0 0.0
  %1401 = vmatpush1.msra.mxu0 0.0
  %1402 = vmatprep.subr.mxu0 0.0
  %1403 = vmatpush1.msra.mxu0 0.0
  %1404 = vmatprep.subr.mxu0 0.0
  %1405 = vmatpush1.msra.mxu0 0.0
  %1406 = vmatprep.subr.mxu0 0.0
  %1407 = vmatpush1.msra.mxu0 0.0
  %1408 = vmatprep.subr.mxu0 0.0
  %1409 = vmatpush1.msra.mxu0 0.0
  %1410 = vmatprep.subr.mxu0 0.0
  %1411 = vmatpush1.msra.mxu0 0.0
  %1412 = vmatprep.subr.mxu0 0.0
  %1413 = vmatpush1.msra.mxu0 0.0
  %1414 = vmatprep.subr.mxu0 0.0
  %1415 = vmatpush1.msra.mxu0 %v1285
  %1416 = vmatprep.subr.mxu0 0.0
  %1417 = vmatpush1.msra.mxu0 %v1284
  %1418 = vmatprep.subr.mxu0 0.0
  %1419 = vmatpush1.msra.mxu0 %v1283
  %1420 = vmatprep.subr.mxu0 0.0
  %1421 = vmatpush1.msra.mxu0 %v1282
  %1422 = vmatprep.subr.mxu0 0.0
  %1423 = vmatpush2.msra.mxu0 0.0
  %1424 = vmatprep.subr.mxu0 0.0
  %1425 = vmatpush2.msra.mxu0 0.0
  %1426 = vmatprep.subr.mxu0 0.0
  %1427 = vmatpush2.msra.mxu0 0.0
  %1428 = vmatprep.subr.mxu0 0.0
  %1429 = vmatpush2.msra.mxu0 0.0
  %1430 = vmatprep.subr.mxu0 0.0
  %1431 = vmatpush2.msra.mxu0 0.0
  %1432 = vmatprep.subr.mxu0 0.0
  %1433 = vmatpush2.msra.mxu0 0.0
  %1434 = vmatprep.subr.mxu0 0.0
  %1435 = vmatpush2.msra.mxu0 0.0
  %1436 = vmatprep.subr.mxu0 0.0
  %1437 = vmatpush2.msra.mxu0 0.0
  %1438 = vmatprep.subr.mxu0 0.0
  %1439 = vmatpush2.msra.mxu0 0.0
  %1440 = vmatprep.subr.mxu0 0.0
  %1441 = vmatpush2.msra.mxu0 0.0
  %1442 = vmatprep.subr.mxu0 0.0
  %1443 = vmatpush2.msra.mxu0 0.0
  %1444 = vmatprep.subr.mxu0 0.0
  %1445 = vmatpush2.msra.mxu0 0.0
  %1446 = vmatprep.subr.mxu0 0.0
  %1447 = vmatpush2.msra.mxu0 0.0
  %1448 = vmatprep.subr.mxu0 0.0
  %1449 = vmatpush2.msra.mxu0 0.0
  %1450 = vmatprep.subr.mxu0 0.0
  %1451 = vmatpush2.msra.mxu0 0.0
  %1452 = vmatprep.subr.mxu0 0.0
  %1453 = vmatpush2.msra.mxu0 0.0
  %1454 = vmatprep.mubr.f32.mxu0 0.0
  %1455 = vmatmul.mubr.f32.gmra.mxu0 %v1385
  %v1456 = vpop.f32.mrf.mxu0
  %v1457 = vadd.f32 %v1383, %v1456
  %v1458 = vpop.f32.mrf.mxu0
  %1459 = vmatprep.mubr.f32.mxu0 0.0
  %1460 = vmatmul.mubr.f32.gmra.mxu0 %v1388
  %v1461 = vpop.f32.mrf.mxu0
  %v1462 = vadd.f32 %v1383, %v1461
  %v1463 = vpop.f32.mrf.mxu0
  %1464 = vdwg.mxu0
  %v1467 = vunpack.c.l.s4 1966171168
  %v1468 = vunpack.c.0.s8 %v1467
  %v1469 = vlaneseq
  %v1470 = vshrl.u32 %v1469, 7
  %v1471 = vsub.s32 %v1468, %v1470
  %v1472 = vrot.slane %v1377, %v1471
  %v1473 = vcombine.high %v1472, %v1472
  %v1475 = vunpack.c.l.s4 1966171168
  %v1476 = vunpack.c.0.s8 %v1475
  %v1477 = vlaneseq
  %v1478 = vshrl.u32 %v1477, 7
  %v1479 = vsub.s32 %v1476, %v1478
  %v1480 = vrot.slane %v1472, %v1479
  %v1482 = vunpack.c.l.s4 1966171168
  %v1483 = vunpack.c.0.s8 %v1482
  %v1484 = vlaneseq
  %v1485 = vshrl.u32 %v1484, 7
  %v1486 = vsub.s32 %v1483, %v1485
  %v1487 = vrot.slane %v1473, %v1486
  %v1488 = vlaneseq
  %v1489 = vshrl.u32 %v1488, 7
  %v1490 = vsub.s32 0, %v1489
  %v1491 = vrot.slane %v1480, %v1490
  %v1492 = vlaneseq
  %v1493 = vshrl.u32 %v1492, 7
  %v1494 = vsub.s32 0, %v1493
  %v1495 = vrot.slane %v1487, %v1494
  %v1498 = vadd.f32 %v1457, %v1491
  %v1499 = vadd.f32 %v1462, %v1495
  %v1500 = vmax.f32 %v1498, 0.0
  %v1501 = vmax.f32 %v1499, 0.0
  %v1502 = vsel %vm1080, %v1500, -inf
  %v1503 = vrot.slane %v1502, 4
  %v1504 = vmax.f32 %v1502, %v1503
  %v1505 = vrot.slane %v1504, 2
  %v1506 = vmax.f32 %v1504, %v1505
  %v1507 = vrot.slane %v1506, 1
  %v1508 = vmax.f32 %v1506, %v1507
  %v1509 = vsel %vm1080, %v1501, -inf
  %v1510 = vrot.slane %v1509, 4
  %v1511 = vmax.f32 %v1509, %v1510
  %v1512 = vrot.slane %v1511, 2
  %v1513 = vmax.f32 %v1511, %v1512
  %v1514 = vrot.slane %v1513, 1
  %v1515 = vmax.f32 %v1513, %v1514
  %v1518 = vsel %vm1255, %v1515, %v1508
  %v1519 = vld [vmem:[%s4] sm:$0xff]
  %v1520 = vld [vmem:[%s4 + $0x8] sm:$0xff]
  %v1521 = vld [vmem:[%s4 + $0x10] sm:$0xff]
  %v1522 = vld [vmem:[%s4 + $0x18] sm:$0xff]
  %v1523 = vld [vmem:[%s4 + $0x20] sm:$0x1]
  %v1524 = vld [vmem:[%s4 + $0x28] sm:$0xff]
  %v1525 = vld [vmem:[%s4 + $0x30] sm:$0xff]
  %v1526 = vld [vmem:[%s4 + $0x38] sm:$0xff]
  %v1527 = vld [vmem:[%s4 + $0x40] sm:$0xff]
  %v1528 = vld [vmem:[%s4 + $0x48] sm:$0xff]
  %v1529 = vld [vmem:[%s4 + $0x50] sm:$0xff]
  %v1530 = vld [vmem:[%s4 + $0x58] sm:$0xff]
  %v1531 = vld [vmem:[%s4 + $0x60] sm:$0xff]
  %v1532 = vld [vmem:[%s4 + $0x68] sm:$0xff]
  %v1533 = vld [vmem:[%s4 + $0x70] sm:$0xff]
  %v1534 = vld [vmem:[%s4 + $0x78] sm:$0xff]
  %v1535 = vld [vmem:[%s4 + $0x80] sm:$0xff]
  %v1536 = vld [vmem:[%s4 + $0x88] sm:$0xff]
  %v1537 = vld [vmem:[%s4 + $0x90] sm:$0xff]
  %v1538 = vld [vmem:[%s4 + $0x98] sm:$0xff]
  %v1539 = vld [vmem:[%s4 + $0xa0] sm:$0xff]
  %v1540 = vld [vmem:[%s4 + $0xa8] sm:$0x1]
  %v1541 = vlaneseq
  %v1542 = vshrl.u32 %v1541, 7
  %v1543 = vsub.s32 0, %v1542
  %v1544 = vrot.slane %v1523, %v1543
  %v1546 = vsel %vm1080, %v1500, 0
  %v1549 = vsel %vm1080, %v1501, 0
  %v1551 = vsel %vm1080, %v1518, 0
  %1553 = vmatprep.subr.mxu0 0.0
  %1554 = vmatpush1.msra.mxu0 0.0
  %1555 = vmatprep.subr.mxu0 0.0
  %1556 = vmatpush1.msra.mxu0 0.0
  %1557 = vmatprep.subr.mxu0 0.0
  %1558 = vmatpush1.msra.mxu0 0.0
  %1559 = vmatprep.subr.mxu0 0.0
  %1560 = vmatpush1.msra.mxu0 0.0
  %1561 = vmatprep.subr.mxu0 0.0
  %1562 = vmatpush1.msra.mxu0 0.0
  %1563 = vmatprep.subr.mxu0 0.0
  %1564 = vmatpush1.msra.mxu0 0.0
  %1565 = vmatprep.subr.mxu0 0.0
  %1566 = vmatpush1.msra.mxu0 0.0
  %1567 = vmatprep.subr.mxu0 0.0
  %1568 = vmatpush1.msra.mxu0 0.0
  %1569 = vmatprep.subr.mxu0 0.0
  %1570 = vmatpush1.msra.mxu0 0.0
  %1571 = vmatprep.subr.mxu0 0.0
  %1572 = vmatpush1.msra.mxu0 0.0
  %1573 = vmatprep.subr.mxu0 0.0
  %1574 = vmatpush1.msra.mxu0 0.0
  %1575 = vmatprep.subr.mxu0 0.0
  %1576 = vmatpush1.msra.mxu0 0.0
  %1577 = vmatprep.subr.mxu0 0.0
  %1578 = vmatpush1.msra.mxu0 %v1522
  %1579 = vmatprep.subr.mxu0 0.0
  %1580 = vmatpush1.msra.mxu0 %v1521
  %1581 = vmatprep.subr.mxu0 0.0
  %1582 = vmatpush1.msra.mxu0 %v1520
  %1583 = vmatprep.subr.mxu0 0.0
  %1584 = vmatpush1.msra.mxu0 %v1519
  %1585 = vmatprep.subr.mxu0 0.0
  %1586 = vmatpush2.msra.mxu0 0.0
  %1587 = vmatprep.subr.mxu0 0.0
  %1588 = vmatpush2.msra.mxu0 0.0
  %1589 = vmatprep.subr.mxu0 0.0
  %1590 = vmatpush2.msra.mxu0 0.0
  %1591 = vmatprep.subr.mxu0 0.0
  %1592 = vmatpush2.msra.mxu0 0.0
  %1593 = vmatprep.subr.mxu0 0.0
  %1594 = vmatpush2.msra.mxu0 0.0
  %1595 = vmatprep.subr.mxu0 0.0
  %1596 = vmatpush2.msra.mxu0 0.0
  %1597 = vmatprep.subr.mxu0 0.0
  %1598 = vmatpush2.msra.mxu0 0.0
  %1599 = vmatprep.subr.mxu0 0.0
  %1600 = vmatpush2.msra.mxu0 0.0
  %1601 = vmatprep.subr.mxu0 0.0
  %1602 = vmatpush2.msra.mxu0 0.0
  %1603 = vmatprep.subr.mxu0 0.0
  %1604 = vmatpush2.msra.mxu0 0.0
  %1605 = vmatprep.subr.mxu0 0.0
  %1606 = vmatpush2.msra.mxu0 0.0
  %1607 = vmatprep.subr.mxu0 0.0
  %1608 = vmatpush2.msra.mxu0 0.0
  %1609 = vmatprep.subr.mxu0 0.0
  %1610 = vmatpush2.msra.mxu0 0.0
  %1611 = vmatprep.subr.mxu0 0.0
  %1612 = vmatpush2.msra.mxu0 0.0
  %1613 = vmatprep.subr.mxu0 0.0
  %1614 = vmatpush2.msra.mxu0 0.0
  %1615 = vmatprep.subr.mxu0 0.0
  %1616 = vmatpush2.msra.mxu0 0.0
  %1617 = vmatprep.mubr.f32.mxu0 0.0
  %1618 = vmatmul.mubr.f32.gmra.mxu0 %v1546
  %v1619 = vpop.f32.mrf.mxu0
  %v1620 = vadd.f32 %v1544, %v1619
  %v1621 = vpop.f32.mrf.mxu0
  %1622 = vmatprep.mubr.f32.mxu0 0.0
  %1623 = vmatmul.mubr.f32.gmra.mxu0 %v1549
  %v1624 = vpop.f32.mrf.mxu0
  %v1625 = vadd.f32 %v1544, %v1624
  %v1626 = vpop.f32.mrf.mxu0
  %1627 = vmatprep.mubr.f32.mxu0 0.0
  %1628 = vmatmul.mubr.f32.gmra.mxu0 %v1551
  %v1629 = vpop.f32.mrf.mxu0
  %v1630 = vadd.f32 %v1544, %v1629
  %v1631 = vpop.f32.mrf.mxu0
  %1632 = vdwg.mxu0
  %v1633 = vmax.f32 %v1620, 0.0
  %v1634 = vmax.f32 %v1625, 0.0
  %v1635 = vmax.f32 %v1630, 0.0
  %v1636 = vlaneseq
  %v1637 = vshrl.u32 %v1636, 7
  %v1638 = vsub.s32 0, %v1637
  %v1639 = vrot.slane %v1540, %v1638
  %1640 = vmatprep.subr.mxu0 0.0
  %1641 = vmatpush1.msra.mxu0 %v1539
  %1642 = vmatprep.subr.mxu0 0.0
  %1643 = vmatpush1.msra.mxu0 %v1538
  %1644 = vmatprep.subr.mxu0 0.0
  %1645 = vmatpush1.msra.mxu0 %v1537
  %1646 = vmatprep.subr.mxu0 0.0
  %1647 = vmatpush1.msra.mxu0 %v1536
  %1648 = vmatprep.subr.mxu0 0.0
  %1649 = vmatpush1.msra.mxu0 %v1535
  %1650 = vmatprep.subr.mxu0 0.0
  %1651 = vmatpush1.msra.mxu0 %v1534
  %1652 = vmatprep.subr.mxu0 0.0
  %1653 = vmatpush1.msra.mxu0 %v1533
  %1654 = vmatprep.subr.mxu0 0.0
  %1655 = vmatpush1.msra.mxu0 %v1532
  %1656 = vmatprep.subr.mxu0 0.0
  %1657 = vmatpush1.msra.mxu0 %v1531
  %1658 = vmatprep.subr.mxu0 0.0
  %1659 = vmatpush1.msra.mxu0 %v1530
  %1660 = vmatprep.subr.mxu0 0.0
  %1661 = vmatpush1.msra.mxu0 %v1529
  %1662 = vmatprep.subr.mxu0 0.0
  %1663 = vmatpush1.msra.mxu0 %v1528
  %1664 = vmatprep.subr.mxu0 0.0
  %1665 = vmatpush1.msra.mxu0 %v1527
  %1666 = vmatprep.subr.mxu0 0.0
  %1667 = vmatpush1.msra.mxu0 %v1526
  %1668 = vmatprep.subr.mxu0 0.0
  %1669 = vmatpush1.msra.mxu0 %v1525
  %1670 = vmatprep.subr.mxu0 0.0
  %1671 = vmatpush1.msra.mxu0 %v1524
  %1672 = vmatprep.subr.mxu0 0.0
  %1673 = vmatpush2.msra.mxu0 0.0
  %1674 = vmatprep.subr.mxu0 0.0
  %1675 = vmatpush2.msra.mxu0 0.0
  %1676 = vmatprep.subr.mxu0 0.0
  %1677 = vmatpush2.msra.mxu0 0.0
  %1678 = vmatprep.subr.mxu0 0.0
  %1679 = vmatpush2.msra.mxu0 0.0
  %1680 = vmatprep.subr.mxu0 0.0
  %1681 = vmatpush2.msra.mxu0 0.0
  %1682 = vmatprep.subr.mxu0 0.0
  %1683 = vmatpush2.msra.mxu0 0.0
  %1684 = vmatprep.subr.mxu0 0.0
  %1685 = vmatpush2.msra.mxu0 0.0
  %1686 = vmatprep.subr.mxu0 0.0
  %1687 = vmatpush2.msra.mxu0 0.0
  %1688 = vmatprep.subr.mxu0 0.0
  %1689 = vmatpush2.msra.mxu0 0.0
  %1690 = vmatprep.subr.mxu0 0.0
  %1691 = vmatpush2.msra.mxu0 0.0
  %1692 = vmatprep.subr.mxu0 0.0
  %1693 = vmatpush2.msra.mxu0 0.0
  %1694 = vmatprep.subr.mxu0 0.0
  %1695 = vmatpush2.msra.mxu0 0.0
  %1696 = vmatprep.subr.mxu0 0.0
  %1697 = vmatpush2.msra.mxu0 0.0
  %1698 = vmatprep.subr.mxu0 0.0
  %1699 = vmatpush2.msra.mxu0 0.0
  %1700 = vmatprep.subr.mxu0 0.0
  %1701 = vmatpush2.msra.mxu0 0.0
  %1702 = vmatprep.subr.mxu0 0.0
  %1703 = vmatpush2.msra.mxu0 0.0
  %1704 = vmatprep.mubr.f32.mxu0 0.0
  %1705 = vmatmul.mubr.f32.gmra.mxu0 %v1633
  %v1706 = vpop.f32.mrf.mxu0
  %v1707 = vadd.f32 %v1639, %v1706
  %v1708 = vpop.f32.mrf.mxu0
  %1709 = vmatprep.mubr.f32.mxu0 0.0
  %1710 = vmatmul.mubr.f32.gmra.mxu0 %v1634
  %v1711 = vpop.f32.mrf.mxu0
  %v1712 = vadd.f32 %v1639, %v1711
  %v1713 = vpop.f32.mrf.mxu0
  %1714 = vmatprep.mubr.f32.mxu0 0.0
  %1715 = vmatmul.mubr.f32.gmra.mxu0 %v1635
  %v1716 = vpop.f32.mrf.mxu0
  %v1717 = vadd.f32 %v1639, %v1716
  %v1718 = vpop.f32.mrf.mxu0
  %1719 = vdwg.mxu0
  %v1720 = vlaneseq
  %v1721 = vand.u32 %v1720, 127
  %vm1722 = vcmp.eq.s32.totalorder %v1721, 7
  %v1723 = vxor.u32 %v1707, 2147483648
  %v1724 = vxor.u32 %v1712, 2147483648
  %v1725 = vxor.u32 %v1717, 2147483648
  %v1726 = vmul.f32 %v1723, 1.442695
  %v1727 = vpow.pop %v1726
  %v1728 = vmul.f32 %v1724, 1.442695
  %v1729 = vpow.pop %v1728
  %v1730 = vmul.f32 %v1725, 1.442695
  %v1731 = vpow.pop %v1730
  %v1732 = vadd.f32 %v1727, 1.0
  %v1733 = vadd.f32 %v1729, 1.0
  %v1734 = vadd.f32 %v1731, 1.0
  %v1735 = vrcp.pop %v1732
  %v1736 = vmul.f32 1.0, %v1735
  %v1737 = vrcp.pop %v1733
  %v1738 = vmul.f32 1.0, %v1737
  %v1739 = vrcp.pop %v1734
  %v1740 = vmul.f32 1.0, %v1739
  %v1741 = vsel %vm1722, %v1736, %v1707
  %v1742 = vsel %vm1722, %v1738, %v1712
  %v1743 = vsel %vm1722, %v1740, %v1717
  %1744 = vst [vmem:[%s5] sm:$0xff] %v1741
  %1745 = vst [vmem:[%s5 + $0x8] sm:$0xff] %v1742
  %1746 = vst [vmem:[%s5 + $0x10] sm:$0x3] %v1743
  // Predicated region
  $region22: #{forward.1} parent=0 // pred_check
    _
  $region23: #{forward.1} parent=0 // pred_check_branch
    %1748 = sbr.rel (0) target = $region25
  $region24: #{forward.1} parent=0 // pred_region
    _
  $region25: #{forward.1} parent=0 // pred_fallthru
    _
  // Predicated region
  $region26: #{forward.1} parent=0 // pred_check
    _
  $region27: #{forward.1} parent=0 // pred_check_branch
    %1750 = sbr.rel (0) target = $region29
  $region28: #{forward.1} parent=0 // pred_region
    _
  $region29: #{forward.1} parent=0 // pred_fallthru
    _

</llo_original>
